<compile_context>
chip_gen: v5e
topology: v5e:2x2
jax: 0.10.0
libtpu: 0.0.40
codegen_flags: <defaults>
</compile_context>

<pallas_src>
import jax
import jax.numpy as jnp
from jax.experimental import pallas as pl
from jax.experimental.pallas import tpu as pltpu


def _round_up(x, m):
    return ((x + m - 1) // m) * m


def _pad2(a, rows, cols):
    r, c = a.shape
    return jnp.pad(a, ((0, rows - r), (0, cols - c)))


def _generic_block_kernel(
    x_ref,
    w1_ref, b1_ref,
    w2_ref, b2_ref,
    w3_ref, b3_ref,
    w4_ref, b4_ref,
    wt_ref,           # fused [theta_b | theta_f] weight, (H, TD2), bf16
    wh_ref, bh_ref,   # block-diagonal fused head weight (TD2, OUT) bf16 + bias (1, OUT) f32
    out_ref,          # fused lane-dense output tile (TILE_B, OUT), f32
):
    bf16 = jnp.bfloat16
    x = x_ref[...]                                    # bf16 (TILE_B, IN)

    # fc1 — NO activation (matches the PyTorch forward). bf16 MXU, f32 accumulate.
    h = jnp.dot(x, w1_ref[...], preferred_element_type=jnp.float32) + b1_ref[...]

    # fc2..fc4 with ReLU. Bias + ReLU run on the f32 accumulator (v5e VPU has no
    # bf16); activations drop to bf16 only to feed the next MXU matmul.
    h = jnp.maximum(
        jnp.dot(h.astype(bf16), w2_ref[...], preferred_element_type=jnp.float32)
        + b2_ref[...], 0.0)
    h = jnp.maximum(
        jnp.dot(h.astype(bf16), w3_ref[...], preferred_element_type=jnp.float32)
        + b3_ref[...], 0.0)
    h = jnp.maximum(
        jnp.dot(h.astype(bf16), w4_ref[...], preferred_element_type=jnp.float32)
        + b4_ref[...], 0.0)

    # Fused theta projection: theta = [theta_b | theta_f]  (bias-free).
    theta = jnp.dot(h.astype(bf16), wt_ref[...], preferred_element_type=jnp.float32)

    # Fused block-diagonal head: out = [backcast | forecast] (+ concatenated bias)
    # -> one lane-dense, unmasked 128-wide store. Exact (off-diagonal blocks are
    # zero); fine for tiny thetas_dim — for large td split into two dots over
    # adjacent 128-aligned column ranges instead.
    out = jnp.dot(theta.astype(bf16), wh_ref[...],
                  preferred_element_type=jnp.float32) + bh_ref[...]
    out_ref[...] = out.astype(out_ref.dtype)


def prepare_params(params):
    """One-time weight pack/pad/fuse (hoisted out of the per-forward path).

    params: dict of (in, out) f32 weights and (1, out) f32 biases.
    Returns a dict of padded bf16 weights / f32 biases plus static dims.
    """
    in_dim, units = params["w1"].shape
    td = params["wtb"].shape[1]
    bc = params["wbc"].shape[1]
    fc = params["wfc"].shape[1]

    # Lane-padded feature dims (zero padding is mathematically exact).
    H = _round_up(units, 128)
    TD2 = _round_up(2 * td, 128)
    OUT = _round_up(bc + fc, 128)

    bf16, f32 = jnp.bfloat16, jnp.float32

    # Block-diagonal fused head: rows [0:td] x cols [0:bc]    = wbc,
    #                            rows [td:2td] x cols [bc:bc+fc] = wfc.
    wh = jnp.zeros((TD2, OUT), f32)
    wh = wh.at[:td, :bc].set(params["wbc"].astype(f32))
    wh = wh.at[td:2 * td, bc:bc + fc].set(params["wfc"].astype(f32))
    bh = jnp.zeros((1, OUT), f32)
    bh = bh.at[:, :bc].set(params["bbc"].astype(f32))
    bh = bh.at[:, bc:bc + fc].set(params["bfc"].astype(f32))

    packed = {
        # x's feature dim stays UNPADDED, so w1 keeps in_dim rows.
        "w1": _pad2(params["w1"].astype(f32), in_dim, H).astype(bf16),
        "b1": _pad2(params["b1"].astype(f32), 1, H),
        "w2": _pad2(params["w2"].astype(f32), H, H).astype(bf16),
        "b2": _pad2(params["b2"].astype(f32), 1, H),
        "w3": _pad2(params["w3"].astype(f32), H, H).astype(bf16),
        "b3": _pad2(params["b3"].astype(f32), 1, H),
        "w4": _pad2(params["w4"].astype(f32), H, H).astype(bf16),
        "b4": _pad2(params["b4"].astype(f32), 1, H),
        "wt": _pad2(jnp.concatenate(
            [params["wtb"].astype(f32), params["wtf"].astype(f32)], axis=1),
            H, TD2).astype(bf16),
        "wh": wh.astype(bf16),
        "bh": bh,
        "dims": dict(in_dim=in_dim, units=units, td=td, bc=bc, fc=fc,
                     H=H, TD2=TD2, OUT=OUT),
    }
    # Materialize once, here, so no packing work leaks into the forward path.
    return {k: (jax.block_until_ready(v) if isinstance(v, jax.Array) else v)
            for k, v in packed.items()}


def generic_block(x, packed, *, tile_b=1024):
    """x: (B, backcast_length) f32. packed: output of prepare_params().

    Returns (backcast (B, backcast_length), forecast (B, forecast_length)), f32.
    """
    d = packed["dims"]
    in_dim, bc, fc = d["in_dim"], d["bc"], d["fc"]
    H, TD2, OUT = d["H"], d["TD2"], d["OUT"]
    IN = in_dim            # x feature dim: full-dim block (no 128-lane padding)

    f32, bf16 = jnp.float32, jnp.bfloat16
    B = x.shape[0]

    # --- batch tile selection --------------------------------------------------
    #  * multiple of 16 (bf16 sublane packing), >= 16
    #  * at least 2 grid steps when B allows (both v7x TensorCores get work)
    #  * shrunk if the VMEM working set exceeds the per-core budget
    TILE_B = min(_round_up(B, 16), max(16, _round_up(tile_b, 16)))
    TILE_B = min(TILE_B, max(16, _round_up((B + 1) // 2, 16)))

    try:
        vmem_phys = pltpu.get_tpu_info().vmem_capacity_bytes
    except Exception:
        vmem_phys = 64 * 1024 * 1024           # conservative (v7x-sized)
    vmem_cap = int(vmem_phys * 3 // 4)         # ~48 MiB on v7x, ~96 MiB on v5e/v6e

    weight_bytes = 2 * (IN * H + 3 * H * H + H * TD2 + TD2 * OUT)   # bf16, 1 buffer
    bias_bytes = 4 * (4 * H + OUT)                                   # f32

    def working_set(tb):
        io = 2 * (2 * tb * IN) + 2 * (4 * tb * OUT)    # double-buffered x (bf16) / out (f32)
        interm = 4 * tb * (2 * H + TD2 + OUT)          # f32 h / theta / out live values
        return weight_bytes + bias_bytes + io + interm

    while TILE_B > 16 and working_set(TILE_B) > vmem_cap:
        TILE_B = max(16, _round_up(TILE_B // 2, 16))

    B_pad = _round_up(B, TILE_B)
    grid = (B_pad // TILE_B,)

    # Only the batch dim is padded; the tiny feature dim is streamed as-is.
    x_pad = jnp.pad(x, ((0, B_pad - B), (0, 0))).astype(bf16)

    vmem_limit = int(min(max(working_set(TILE_B) * 3 // 2, 16 * 1024 * 1024), vmem_cap))

    matmul_flops = 2 * B_pad * (IN * H + 3 * H * H + H * TD2 + TD2 * OUT)
    bytes_accessed = 2 * B_pad * IN + 4 * B_pad * OUT + weight_bytes + bias_bytes
    cost = pl.CostEstimate(flops=int(matmul_flops), transcendentals=0,
                           bytes_accessed=int(bytes_accessed))

    compiler_params = pltpu.CompilerParams(
        dimension_semantics=("parallel",),     # shards batch grid across TCs on v7x
        vmem_limit_bytes=vmem_limit,
    )

    def batch_spec(feat):
        return pl.BlockSpec((TILE_B, feat), lambda i: (i, 0))

    def build_call(single_buffer_weights):
        if single_buffer_weights:
            def resident_spec(shape):
                # Constant index_map keeps the block resident across the grid;
                # Buffered(1) drops the redundant second pipeline buffer
                # (halves resident-weight VMEM).
                return pl.BlockSpec(shape, lambda i: (0, 0),
                                    pipeline_mode=pl.Buffered(1))
        else:
            def resident_spec(shape):
                return pl.BlockSpec(shape, lambda i: (0, 0))

        in_specs = [
            batch_spec(IN),                                      # x tile
            resident_spec((IN, H)), resident_spec((1, H)),       # w1, b1
            resident_spec((H, H)), resident_spec((1, H)),        # w2, b2
            resident_spec((H, H)), resident_spec((1, H)),        # w3, b3
            resident_spec((H, H)), resident_spec((1, H)),        # w4, b4
            resident_spec((H, TD2)),                             # fused theta weight
            resident_spec((TD2, OUT)), resident_spec((1, OUT)),  # fused head weight + bias
        ]
        return pl.pallas_call(
            _generic_block_kernel,
            out_shape=jax.ShapeDtypeStruct((B_pad, OUT), f32),
            grid=grid,
            in_specs=in_specs,
            out_specs=batch_spec(OUT),
            compiler_params=compiler_params,
            cost_estimate=cost,
        )

    args = (x_pad,
            packed["w1"], packed["b1"], packed["w2"], packed["b2"],
            packed["w3"], packed["b3"], packed["w4"], packed["b4"],
            packed["wt"], packed["wh"], packed["bh"])

    try:
        out = build_call(True)(*args)
    except Exception:
        # Fallback if this JAX build rejects single-buffered BlockSpecs.
        out = build_call(False)(*args)

    backcast = out[:B, :bc]
    forecast = out[:B, bc:bc + fc]
    return backcast, forecast


def init_params(key, units, thetas_dim, backcast_length, forecast_length):
    """Deterministic synthetic parameters. Weights stored as (in, out)."""
    ks = jax.random.split(key, 14)
    s = 0.1

    def w(k, i, o):
        return jax.random.normal(k, (i, o), jnp.float32) * s

    def b(k, o):
        return jax.random.normal(k, (1, o), jnp.float32) * s

    return {
        "w1": w(ks[0], backcast_length, units), "b1": b(ks[1], units),
        "w2": w(ks[2], units, units),           "b2": b(ks[3], units),
        "w3": w(ks[4], units, units),           "b3": b(ks[5], units),
        "w4": w(ks[6], units, units),           "b4": b(ks[7], units),
        "wtb": w(ks[8], units, thetas_dim),     # theta_b_fc (no bias)
        "wtf": w(ks[9], units, thetas_dim),     # theta_f_fc (no bias)
        "wbc": w(ks[10], thetas_dim, backcast_length), "bbc": b(ks[11], backcast_length),
        "wfc": w(ks[12], thetas_dim, forecast_length), "bfc": b(ks[13], forecast_length),
    }


def generic_block_ref(x, p):
    """Pure-JAX f32 reference of the PyTorch forward (no ReLU after fc1)."""
    h = x @ p["w1"] + p["b1"]
    h = jnp.maximum(h @ p["w2"] + p["b2"], 0.0)
    h = jnp.maximum(h @ p["w3"] + p["b3"], 0.0)
    h = jnp.maximum(h @ p["w4"] + p["b4"], 0.0)
    theta_b = h @ p["wtb"]
    theta_f = h @ p["wtf"]
    return theta_b @ p["wbc"] + p["bbc"], theta_f @ p["wfc"] + p["bfc"]


if __name__ == "__main__":
    units = 32
    thetas_dim = 8
    backcast_length = 10
    forecast_length = 5
    batch = 8

    key = jax.random.PRNGKey(0)
    kx, kp = jax.random.split(key)
    x = jax.random.normal(kx, (batch, backcast_length), jnp.float32)
    params = init_params(kp, units, thetas_dim, backcast_length, forecast_length)

    packed = prepare_params(params)          # one-time pack (not per forward)
    backcast, forecast = jax.block_until_ready(generic_block(x, packed))

    bc_ref, fc_ref = generic_block_ref(x, params)
    assert backcast.shape == (batch, backcast_length)
    assert forecast.shape == (batch, forecast_length)
    # bf16 MXU matmuls (f32 accumulate) vs pure-f32 reference -> loosened tolerance.
    assert jnp.allclose(backcast, bc_ref, atol=3e-2, rtol=3e-2), \
        float(jnp.max(jnp.abs(backcast - bc_ref)))
    assert jnp.allclose(forecast, fc_ref, atol=3e-2, rtol=3e-2), \
        float(jnp.max(jnp.abs(forecast - fc_ref)))

    print("KERNEL_OK")
</pallas_src>

<mosaic_0001>
module attributes {stable_mosaic.version = 11 : i64} {
  func.func @_generic_block_kernel(%arg0: i32, %arg1: memref<16x10xbf16, #tpu.memory_space<vmem>>, %arg2: memref<10x128xbf16, #tpu.memory_space<vmem>>, %arg3: memref<1x128xf32, #tpu.memory_space<vmem>>, %arg4: memref<128x128xbf16, #tpu.memory_space<vmem>>, %arg5: memref<1x128xf32, #tpu.memory_space<vmem>>, %arg6: memref<128x128xbf16, #tpu.memory_space<vmem>>, %arg7: memref<1x128xf32, #tpu.memory_space<vmem>>, %arg8: memref<128x128xbf16, #tpu.memory_space<vmem>>, %arg9: memref<1x128xf32, #tpu.memory_space<vmem>>, %arg10: memref<128x128xbf16, #tpu.memory_space<vmem>>, %arg11: memref<128x128xbf16, #tpu.memory_space<vmem>>, %arg12: memref<1x128xf32, #tpu.memory_space<vmem>>, %arg13: memref<16x128xf32, #tpu.memory_space<vmem>>) attributes {dimension_semantics = [#tpu.dimension_semantics<parallel>], iteration_bounds = array<i64: 1>, scalar_prefetch = 0 : i64, scratch_operands = 0 : i64, tpu.core_type = #tpu.core_type<tc>, window_params = [{transform_indices = @transform_0, window_bounds = array<i64: 16, 10>}, {pipeline_mode = #tpu.pipeline_mode<synchronous>, transform_indices = @transform_1, window_bounds = array<i64: 10, 128>}, {pipeline_mode = #tpu.pipeline_mode<synchronous>, transform_indices = @transform_2, window_bounds = array<i64: 1, 128>}, {pipeline_mode = #tpu.pipeline_mode<synchronous>, transform_indices = @transform_3, window_bounds = array<i64: 128, 128>}, {pipeline_mode = #tpu.pipeline_mode<synchronous>, transform_indices = @transform_4, window_bounds = array<i64: 1, 128>}, {pipeline_mode = #tpu.pipeline_mode<synchronous>, transform_indices = @transform_5, window_bounds = array<i64: 128, 128>}, {pipeline_mode = #tpu.pipeline_mode<synchronous>, transform_indices = @transform_6, window_bounds = array<i64: 1, 128>}, {pipeline_mode = #tpu.pipeline_mode<synchronous>, transform_indices = @transform_7, window_bounds = array<i64: 128, 128>}, {pipeline_mode = #tpu.pipeline_mode<synchronous>, transform_indices = @transform_8, window_bounds = array<i64: 1, 128>}, {pipeline_mode = #tpu.pipeline_mode<synchronous>, transform_indices = @transform_9, window_bounds = array<i64: 128, 128>}, {pipeline_mode = #tpu.pipeline_mode<synchronous>, transform_indices = @transform_10, window_bounds = array<i64: 128, 128>}, {pipeline_mode = #tpu.pipeline_mode<synchronous>, transform_indices = @transform_11, window_bounds = array<i64: 1, 128>}, {transform_indices = @transform_12, window_bounds = array<i64: 16, 128>}]} {
    %c0 = arith.constant 0 : index
    %c0_0 = arith.constant 0 : index
    %0 = vector.load %arg1[%c0, %c0_0] : memref<16x10xbf16, #tpu.memory_space<vmem>>, vector<16x10xbf16>
    %c0_1 = arith.constant 0 : index
    %c0_2 = arith.constant 0 : index
    %1 = vector.load %arg2[%c0_1, %c0_2] : memref<10x128xbf16, #tpu.memory_space<vmem>>, vector<10x128xbf16>
    %cst = arith.constant dense<0.000000e+00> : vector<16x128xf32>
    %2 = tpu.matmul %0, %1, %cst {dimension_numbers = #tpu.dot_dimension_numbers<[1], [0], [0], [1], [0, 0, 1, 1], [], []>} : vector<16x10xbf16>, vector<10x128xbf16>, vector<16x128xf32> -> vector<16x128xf32>
    %c0_3 = arith.constant 0 : index
    %c0_4 = arith.constant 0 : index
    %3 = vector.load %arg3[%c0_3, %c0_4] : memref<1x128xf32, #tpu.memory_space<vmem>>, vector<1x128xf32>
    %4 = vector.broadcast %3 : vector<1x128xf32> to vector<16x128xf32>
    %5 = arith.addf %2, %4 : vector<16x128xf32>
    %6 = arith.truncf %5 : vector<16x128xf32> to vector<16x128xbf16>
    %c0_5 = arith.constant 0 : index
    %c0_6 = arith.constant 0 : index
    %7 = vector.load %arg4[%c0_5, %c0_6] : memref<128x128xbf16, #tpu.memory_space<vmem>>, vector<128x128xbf16>
    %cst_7 = arith.constant dense<0.000000e+00> : vector<16x128xf32>
    %8 = tpu.matmul %6, %7, %cst_7 {dimension_numbers = #tpu.dot_dimension_numbers<[1], [0], [0], [1], [0, 0, 1, 1], [], []>} : vector<16x128xbf16>, vector<128x128xbf16>, vector<16x128xf32> -> vector<16x128xf32>
    %c0_8 = arith.constant 0 : index
    %c0_9 = arith.constant 0 : index
    %9 = vector.load %arg5[%c0_8, %c0_9] : memref<1x128xf32, #tpu.memory_space<vmem>>, vector<1x128xf32>
    %10 = vector.broadcast %9 : vector<1x128xf32> to vector<16x128xf32>
    %11 = arith.addf %8, %10 : vector<16x128xf32>
    %cst_10 = arith.constant 0.000000e+00 : f32
    %12 = vector.broadcast %cst_10 : f32 to vector<16x128xf32>
    %13 = arith.maximumf %11, %12 : vector<16x128xf32>
    %14 = arith.truncf %13 : vector<16x128xf32> to vector<16x128xbf16>
    %c0_11 = arith.constant 0 : index
    %c0_12 = arith.constant 0 : index
    %15 = vector.load %arg6[%c0_11, %c0_12] : memref<128x128xbf16, #tpu.memory_space<vmem>>, vector<128x128xbf16>
    %cst_13 = arith.constant dense<0.000000e+00> : vector<16x128xf32>
    %16 = tpu.matmul %14, %15, %cst_13 {dimension_numbers = #tpu.dot_dimension_numbers<[1], [0], [0], [1], [0, 0, 1, 1], [], []>} : vector<16x128xbf16>, vector<128x128xbf16>, vector<16x128xf32> -> vector<16x128xf32>
    %c0_14 = arith.constant 0 : index
    %c0_15 = arith.constant 0 : index
    %17 = vector.load %arg7[%c0_14, %c0_15] : memref<1x128xf32, #tpu.memory_space<vmem>>, vector<1x128xf32>
    %18 = vector.broadcast %17 : vector<1x128xf32> to vector<16x128xf32>
    %19 = arith.addf %16, %18 : vector<16x128xf32>
    %cst_16 = arith.constant 0.000000e+00 : f32
    %20 = vector.broadcast %cst_16 : f32 to vector<16x128xf32>
    %21 = arith.maximumf %19, %20 : vector<16x128xf32>
    %22 = arith.truncf %21 : vector<16x128xf32> to vector<16x128xbf16>
    %c0_17 = arith.constant 0 : index
    %c0_18 = arith.constant 0 : index
    %23 = vector.load %arg8[%c0_17, %c0_18] : memref<128x128xbf16, #tpu.memory_space<vmem>>, vector<128x128xbf16>
    %cst_19 = arith.constant dense<0.000000e+00> : vector<16x128xf32>
    %24 = tpu.matmul %22, %23, %cst_19 {dimension_numbers = #tpu.dot_dimension_numbers<[1], [0], [0], [1], [0, 0, 1, 1], [], []>} : vector<16x128xbf16>, vector<128x128xbf16>, vector<16x128xf32> -> vector<16x128xf32>
    %c0_20 = arith.constant 0 : index
    %c0_21 = arith.constant 0 : index
    %25 = vector.load %arg9[%c0_20, %c0_21] : memref<1x128xf32, #tpu.memory_space<vmem>>, vector<1x128xf32>
    %26 = vector.broadcast %25 : vector<1x128xf32> to vector<16x128xf32>
    %27 = arith.addf %24, %26 : vector<16x128xf32>
    %cst_22 = arith.constant 0.000000e+00 : f32
    %28 = vector.broadcast %cst_22 : f32 to vector<16x128xf32>
    %29 = arith.maximumf %27, %28 : vector<16x128xf32>
    %30 = arith.truncf %29 : vector<16x128xf32> to vector<16x128xbf16>
    %c0_23 = arith.constant 0 : index
    %c0_24 = arith.constant 0 : index
    %31 = vector.load %arg10[%c0_23, %c0_24] : memref<128x128xbf16, #tpu.memory_space<vmem>>, vector<128x128xbf16>
    %cst_25 = arith.constant dense<0.000000e+00> : vector<16x128xf32>
    %32 = tpu.matmul %30, %31, %cst_25 {dimension_numbers = #tpu.dot_dimension_numbers<[1], [0], [0], [1], [0, 0, 1, 1], [], []>} : vector<16x128xbf16>, vector<128x128xbf16>, vector<16x128xf32> -> vector<16x128xf32>
    %33 = arith.truncf %32 : vector<16x128xf32> to vector<16x128xbf16>
    %c0_26 = arith.constant 0 : index
    %c0_27 = arith.constant 0 : index
    %34 = vector.load %arg11[%c0_26, %c0_27] : memref<128x128xbf16, #tpu.memory_space<vmem>>, vector<128x128xbf16>
    %cst_28 = arith.constant dense<0.000000e+00> : vector<16x128xf32>
    %35 = tpu.matmul %33, %34, %cst_28 {dimension_numbers = #tpu.dot_dimension_numbers<[1], [0], [0], [1], [0, 0, 1, 1], [], []>} : vector<16x128xbf16>, vector<128x128xbf16>, vector<16x128xf32> -> vector<16x128xf32>
    %c0_29 = arith.constant 0 : index
    %c0_30 = arith.constant 0 : index
    %36 = vector.load %arg12[%c0_29, %c0_30] : memref<1x128xf32, #tpu.memory_space<vmem>>, vector<1x128xf32>
    %37 = vector.broadcast %36 : vector<1x128xf32> to vector<16x128xf32>
    %38 = arith.addf %35, %37 : vector<16x128xf32>
    %c0_31 = arith.constant 0 : index
    %c0_32 = arith.constant 0 : index
    %39 = vector.load %arg13[%c0_31, %c0_32] : memref<16x128xf32, #tpu.memory_space<vmem>>, vector<16x128xf32>
    tpu.vector_store %arg13[%c0_31, %c0_32], %38 {strides = array<i32>} : memref<16x128xf32, #tpu.memory_space<vmem>>, vector<16x128xf32>,
    return
  }
  func.func @transform_0(%arg0: i32) -> (i32, i32) {
    %c0_i32 = arith.constant 0 : i32
    %c0_i32_0 = arith.constant 0 : i32
    return %arg0, %c0_i32 : i32, i32
  }
  func.func @transform_1(%arg0: i32) -> (i32, i32) {
    %c0_i32 = arith.constant 0 : i32
    %c0_i32_0 = arith.constant 0 : i32
    %c0_i32_1 = arith.constant 0 : i32
    return %c0_i32, %c0_i32_0 : i32, i32
  }
  func.func @transform_2(%arg0: i32) -> (i32, i32) {
    %c0_i32 = arith.constant 0 : i32
    %c0_i32_0 = arith.constant 0 : i32
    %c0_i32_1 = arith.constant 0 : i32
    return %c0_i32, %c0_i32_0 : i32, i32
  }
  func.func @transform_3(%arg0: i32) -> (i32, i32) {
    %c0_i32 = arith.constant 0 : i32
    %c0_i32_0 = arith.constant 0 : i32
    %c0_i32_1 = arith.constant 0 : i32
    return %c0_i32, %c0_i32_0 : i32, i32
  }
  func.func @transform_4(%arg0: i32) -> (i32, i32) {
    %c0_i32 = arith.constant 0 : i32
    %c0_i32_0 = arith.constant 0 : i32
    %c0_i32_1 = arith.constant 0 : i32
    return %c0_i32, %c0_i32_0 : i32, i32
  }
  func.func @transform_5(%arg0: i32) -> (i32, i32) {
    %c0_i32 = arith.constant 0 : i32
    %c0_i32_0 = arith.constant 0 : i32
    %c0_i32_1 = arith.constant 0 : i32
    return %c0_i32, %c0_i32_0 : i32, i32
  }
  func.func @transform_6(%arg0: i32) -> (i32, i32) {
    %c0_i32 = arith.constant 0 : i32
    %c0_i32_0 = arith.constant 0 : i32
    %c0_i32_1 = arith.constant 0 : i32
    return %c0_i32, %c0_i32_0 : i32, i32
  }
  func.func @transform_7(%arg0: i32) -> (i32, i32) {
    %c0_i32 = arith.constant 0 : i32
    %c0_i32_0 = arith.constant 0 : i32
    %c0_i32_1 = arith.constant 0 : i32
    return %c0_i32, %c0_i32_0 : i32, i32
  }
  func.func @transform_8(%arg0: i32) -> (i32, i32) {
    %c0_i32 = arith.constant 0 : i32
    %c0_i32_0 = arith.constant 0 : i32
    %c0_i32_1 = arith.constant 0 : i32
    return %c0_i32, %c0_i32_0 : i32, i32
  }
  func.func @transform_9(%arg0: i32) -> (i32, i32) {
    %c0_i32 = arith.constant 0 : i32
    %c0_i32_0 = arith.constant 0 : i32
    %c0_i32_1 = arith.constant 0 : i32
    return %c0_i32, %c0_i32_0 : i32, i32
  }
  func.func @transform_10(%arg0: i32) -> (i32, i32) {
    %c0_i32 = arith.constant 0 : i32
    %c0_i32_0 = arith.constant 0 : i32
    %c0_i32_1 = arith.constant 0 : i32
    return %c0_i32, %c0_i32_0 : i32, i32
  }
  func.func @transform_11(%arg0: i32) -> (i32, i32) {
    %c0_i32 = arith.constant 0 : i32
    %c0_i32_0 = arith.constant 0 : i32
    %c0_i32_1 = arith.constant 0 : i32
    return %c0_i32, %c0_i32_0 : i32, i32
  }
  func.func @transform_12(%arg0: i32) -> (i32, i32) {
    %c0_i32 = arith.constant 0 : i32
    %c0_i32_0 = arith.constant 0 : i32
    return %arg0, %c0_i32 : i32, i32
  }
}

module attributes {stable_mosaic.version = 11 : i64} {
  func.func @_generic_block_kernel(%arg0: i32, %arg1: memref<16x10xbf16, #tpu.memory_space<vmem>>, %arg2: memref<10x128xbf16, #tpu.memory_space<vmem>>, %arg3: memref<1x128xf32, #tpu.memory_space<vmem>>, %arg4: memref<128x128xbf16, #tpu.memory_space<vmem>>, %arg5: memref<1x128xf32, #tpu.memory_space<vmem>>, %arg6: memref<128x128xbf16, #tpu.memory_space<vmem>>, %arg7: memref<1x128xf32, #tpu.memory_space<vmem>>, %arg8: memref<128x128xbf16, #tpu.memory_space<vmem>>, %arg9: memref<1x128xf32, #tpu.memory_space<vmem>>, %arg10: memref<128x128xbf16, #tpu.memory_space<vmem>>, %arg11: memref<128x128xbf16, #tpu.memory_space<vmem>>, %arg12: memref<1x128xf32, #tpu.memory_space<vmem>>, %arg13: memref<16x128xf32, #tpu.memory_space<vmem>>) attributes {dimension_semantics = [#tpu.dimension_semantics<parallel>], iteration_bounds = array<i64: 1>, scalar_prefetch = 0 : i64, scratch_operands = 0 : i64, tpu.core_type = #tpu.core_type<tc>, window_params = [{transform_indices = @transform_0, window_bounds = array<i64: 16, 10>}, {pipeline_mode = #tpu.pipeline_mode<synchronous>, transform_indices = @transform_1, window_bounds = array<i64: 10, 128>}, {pipeline_mode = #tpu.pipeline_mode<synchronous>, transform_indices = @transform_2, window_bounds = array<i64: 1, 128>}, {pipeline_mode = #tpu.pipeline_mode<synchronous>, transform_indices = @transform_3, window_bounds = array<i64: 128, 128>}, {pipeline_mode = #tpu.pipeline_mode<synchronous>, transform_indices = @transform_4, window_bounds = array<i64: 1, 128>}, {pipeline_mode = #tpu.pipeline_mode<synchronous>, transform_indices = @transform_5, window_bounds = array<i64: 128, 128>}, {pipeline_mode = #tpu.pipeline_mode<synchronous>, transform_indices = @transform_6, window_bounds = array<i64: 1, 128>}, {pipeline_mode = #tpu.pipeline_mode<synchronous>, transform_indices = @transform_7, window_bounds = array<i64: 128, 128>}, {pipeline_mode = #tpu.pipeline_mode<synchronous>, transform_indices = @transform_8, window_bounds = array<i64: 1, 128>}, {pipeline_mode = #tpu.pipeline_mode<synchronous>, transform_indices = @transform_9, window_bounds = array<i64: 128, 128>}, {pipeline_mode = #tpu.pipeline_mode<synchronous>, transform_indices = @transform_10, window_bounds = array<i64: 128, 128>}, {pipeline_mode = #tpu.pipeline_mode<synchronous>, transform_indices = @transform_11, window_bounds = array<i64: 1, 128>}, {transform_indices = @transform_12, window_bounds = array<i64: 16, 128>}]} {
    %c0 = arith.constant 0 : index
    %c0_0 = arith.constant 0 : index
    %0 = vector.load %arg1[%c0, %c0_0] : memref<16x10xbf16, #tpu.memory_space<vmem>>, vector<16x10xbf16>
    %c0_1 = arith.constant 0 : index
    %c0_2 = arith.constant 0 : index
    %1 = vector.load %arg2[%c0_1, %c0_2] : memref<10x128xbf16, #tpu.memory_space<vmem>>, vector<10x128xbf16>
    %cst = arith.constant dense<0.000000e+00> : vector<16x128xf32>
    %2 = tpu.matmul %0, %1, %cst {dimension_numbers = #tpu.dot_dimension_numbers<[1], [0], [0], [1], [0, 0, 1, 1], [], []>} : vector<16x10xbf16>, vector<10x128xbf16>, vector<16x128xf32> -> vector<16x128xf32>
    %c0_3 = arith.constant 0 : index
    %c0_4 = arith.constant 0 : index
    %3 = vector.load %arg3[%c0_3, %c0_4] : memref<1x128xf32, #tpu.memory_space<vmem>>, vector<1x128xf32>
    %4 = vector.broadcast %3 : vector<1x128xf32> to vector<16x128xf32>
    %5 = arith.addf %2, %4 : vector<16x128xf32>
    %6 = arith.truncf %5 : vector<16x128xf32> to vector<16x128xbf16>
    %c0_5 = arith.constant 0 : index
    %c0_6 = arith.constant 0 : index
    %7 = vector.load %arg4[%c0_5, %c0_6] : memref<128x128xbf16, #tpu.memory_space<vmem>>, vector<128x128xbf16>
    %cst_7 = arith.constant dense<0.000000e+00> : vector<16x128xf32>
    %8 = tpu.matmul %6, %7, %cst_7 {dimension_numbers = #tpu.dot_dimension_numbers<[1], [0], [0], [1], [0, 0, 1, 1], [], []>} : vector<16x128xbf16>, vector<128x128xbf16>, vector<16x128xf32> -> vector<16x128xf32>
    %c0_8 = arith.constant 0 : index
    %c0_9 = arith.constant 0 : index
    %9 = vector.load %arg5[%c0_8, %c0_9] : memref<1x128xf32, #tpu.memory_space<vmem>>, vector<1x128xf32>
    %10 = vector.broadcast %9 : vector<1x128xf32> to vector<16x128xf32>
    %11 = arith.addf %8, %10 : vector<16x128xf32>
    %cst_10 = arith.constant 0.000000e+00 : f32
    %12 = vector.broadcast %cst_10 : f32 to vector<16x128xf32>
    %13 = arith.maximumf %11, %12 : vector<16x128xf32>
    %14 = arith.truncf %13 : vector<16x128xf32> to vector<16x128xbf16>
    %c0_11 = arith.constant 0 : index
    %c0_12 = arith.constant 0 : index
    %15 = vector.load %arg6[%c0_11, %c0_12] : memref<128x128xbf16, #tpu.memory_space<vmem>>, vector<128x128xbf16>
    %cst_13 = arith.constant dense<0.000000e+00> : vector<16x128xf32>
    %16 = tpu.matmul %14, %15, %cst_13 {dimension_numbers = #tpu.dot_dimension_numbers<[1], [0], [0], [1], [0, 0, 1, 1], [], []>} : vector<16x128xbf16>, vector<128x128xbf16>, vector<16x128xf32> -> vector<16x128xf32>
    %c0_14 = arith.constant 0 : index
    %c0_15 = arith.constant 0 : index
    %17 = vector.load %arg7[%c0_14, %c0_15] : memref<1x128xf32, #tpu.memory_space<vmem>>, vector<1x128xf32>
    %18 = vector.broadcast %17 : vector<1x128xf32> to vector<16x128xf32>
    %19 = arith.addf %16, %18 : vector<16x128xf32>
    %cst_16 = arith.constant 0.000000e+00 : f32
    %20 = vector.broadcast %cst_16 : f32 to vector<16x128xf32>
    %21 = arith.maximumf %19, %20 : vector<16x128xf32>
    %22 = arith.truncf %21 : vector<16x128xf32> to vector<16x128xbf16>
    %c0_17 = arith.constant 0 : index
    %c0_18 = arith.constant 0 : index
    %23 = vector.load %arg8[%c0_17, %c0_18] : memref<128x128xbf16, #tpu.memory_space<vmem>>, vector<128x128xbf16>
    %cst_19 = arith.constant dense<0.000000e+00> : vector<16x128xf32>
    %24 = tpu.matmul %22, %23, %cst_19 {dimension_numbers = #tpu.dot_dimension_numbers<[1], [0], [0], [1], [0, 0, 1, 1], [], []>} : vector<16x128xbf16>, vector<128x128xbf16>, vector<16x128xf32> -> vector<16x128xf32>
    %c0_20 = arith.constant 0 : index
    %c0_21 = arith.constant 0 : index
    %25 = vector.load %arg9[%c0_20, %c0_21] : memref<1x128xf32, #tpu.memory_space<vmem>>, vector<1x128xf32>
    %26 = vector.broadcast %25 : vector<1x128xf32> to vector<16x128xf32>
    %27 = arith.addf %24, %26 : vector<16x128xf32>
    %cst_22 = arith.constant 0.000000e+00 : f32
    %28 = vector.broadcast %cst_22 : f32 to vector<16x128xf32>
    %29 = arith.maximumf %27, %28 : vector<16x128xf32>
    %30 = arith.truncf %29 : vector<16x128xf32> to vector<16x128xbf16>
    %c0_23 = arith.constant 0 : index
    %c0_24 = arith.constant 0 : index
    %31 = vector.load %arg10[%c0_23, %c0_24] : memref<128x128xbf16, #tpu.memory_space<vmem>>, vector<128x128xbf16>
    %cst_25 = arith.constant dense<0.000000e+00> : vector<16x128xf32>
    %32 = tpu.matmul %30, %31, %cst_25 {dimension_numbers = #tpu.dot_dimension_numbers<[1], [0], [0], [1], [0, 0, 1, 1], [], []>} : vector<16x128xbf16>, vector<128x128xbf16>, vector<16x128xf32> -> vector<16x128xf32>
    %33 = arith.truncf %32 : vector<16x128xf32> to vector<16x128xbf16>
    %c0_26 = arith.constant 0 : index
    %c0_27 = arith.constant 0 : index
    %34 = vector.load %arg11[%c0_26, %c0_27] : memref<128x128xbf16, #tpu.memory_space<vmem>>, vector<128x128xbf16>
    %cst_28 = arith.constant dense<0.000000e+00> : vector<16x128xf32>
    %35 = tpu.matmul %33, %34, %cst_28 {dimension_numbers = #tpu.dot_dimension_numbers<[1], [0], [0], [1], [0, 0, 1, 1], [], []>} : vector<16x128xbf16>, vector<128x128xbf16>, vector<16x128xf32> -> vector<16x128xf32>
    %c0_29 = arith.constant 0 : index
    %c0_30 = arith.constant 0 : index
    %36 = vector.load %arg12[%c0_29, %c0_30] : memref<1x128xf32, #tpu.memory_space<vmem>>, vector<1x128xf32>
    %37 = vector.broadcast %36 : vector<1x128xf32> to vector<16x128xf32>
    %38 = arith.addf %35, %37 : vector<16x128xf32>
    %c0_31 = arith.constant 0 : index
    %c0_32 = arith.constant 0 : index
    %39 = vector.load %arg13[%c0_31, %c0_32] : memref<16x128xf32, #tpu.memory_space<vmem>>, vector<16x128xf32>
    tpu.vector_store %arg13[%c0_31, %c0_32], %38 {strides = array<i32>} : memref<16x128xf32, #tpu.memory_space<vmem>>, vector<16x128xf32>,
    return
  }
  func.func @transform_0(%arg0: i32) -> (i32, i32) {
    %c0_i32 = arith.constant 0 : i32
    %c0_i32_0 = arith.constant 0 : i32
    return %arg0, %c0_i32 : i32, i32
  }
  func.func @transform_1(%arg0: i32) -> (i32, i32) {
    %c0_i32 = arith.constant 0 : i32
    %c0_i32_0 = arith.constant 0 : i32
    %c0_i32_1 = arith.constant 0 : i32
    return %c0_i32, %c0_i32_0 : i32, i32
  }
  func.func @transform_2(%arg0: i32) -> (i32, i32) {
    %c0_i32 = arith.constant 0 : i32
    %c0_i32_0 = arith.constant 0 : i32
    %c0_i32_1 = arith.constant 0 : i32
    return %c0_i32, %c0_i32_0 : i32, i32
  }
  func.func @transform_3(%arg0: i32) -> (i32, i32) {
    %c0_i32 = arith.constant 0 : i32
    %c0_i32_0 = arith.constant 0 : i32
    %c0_i32_1 = arith.constant 0 : i32
    return %c0_i32, %c0_i32_0 : i32, i32
  }
  func.func @transform_4(%arg0: i32) -> (i32, i32) {
    %c0_i32 = arith.constant 0 : i32
    %c0_i32_0 = arith.constant 0 : i32
    %c0_i32_1 = arith.constant 0 : i32
    return %c0_i32, %c0_i32_0 : i32, i32
  }
  func.func @transform_5(%arg0: i32) -> (i32, i32) {
    %c0_i32 = arith.constant 0 : i32
    %c0_i32_0 = arith.constant 0 : i32
    %c0_i32_1 = arith.constant 0 : i32
    return %c0_i32, %c0_i32_0 : i32, i32
  }
  func.func @transform_6(%arg0: i32) -> (i32, i32) {
    %c0_i32 = arith.constant 0 : i32
    %c0_i32_0 = arith.constant 0 : i32
    %c0_i32_1 = arith.constant 0 : i32
    return %c0_i32, %c0_i32_0 : i32, i32
  }
  func.func @transform_7(%arg0: i32) -> (i32, i32) {
    %c0_i32 = arith.constant 0 : i32
    %c0_i32_0 = arith.constant 0 : i32
    %c0_i32_1 = arith.constant 0 : i32
    return %c0_i32, %c0_i32_0 : i32, i32
  }
  func.func @transform_8(%arg0: i32) -> (i32, i32) {
    %c0_i32 = arith.constant 0 : i32
    %c0_i32_0 = arith.constant 0 : i32
    %c0_i32_1 = arith.constant 0 : i32
    return %c0_i32, %c0_i32_0 : i32, i32
  }
  func.func @transform_9(%arg0: i32) -> (i32, i32) {
    %c0_i32 = arith.constant 0 : i32
    %c0_i32_0 = arith.constant 0 : i32
    %c0_i32_1 = arith.constant 0 : i32
    return %c0_i32, %c0_i32_0 : i32, i32
  }
  func.func @transform_10(%arg0: i32) -> (i32, i32) {
    %c0_i32 = arith.constant 0 : i32
    %c0_i32_0 = arith.constant 0 : i32
    %c0_i32_1 = arith.constant 0 : i32
    return %c0_i32, %c0_i32_0 : i32, i32
  }
  func.func @transform_11(%arg0: i32) -> (i32, i32) {
    %c0_i32 = arith.constant 0 : i32
    %c0_i32_0 = arith.constant 0 : i32
    %c0_i32_1 = arith.constant 0 : i32
    return %c0_i32, %c0_i32_0 : i32, i32
  }
  func.func @transform_12(%arg0: i32) -> (i32, i32) {
    %c0_i32 = arith.constant 0 : i32
    %c0_i32_0 = arith.constant 0 : i32
    return %arg0, %c0_i32 : i32, i32
  }
}

</mosaic_0001>

<llo_original>
// kernel: tpu_custom_call.1
$region0: #{tpu_custom_call.1}
  #allocation0 [shape = 'u32[]', space=smem, size = 0x4, offset = 0x4, fixed_abs, tag = 'smem constant byte address 0x4 - core index']
  #allocation1 [shape = 'u32[72,128]{1,0:T(1,128)}', space=vmem, size = 0x9000, scoped, tag = 'internal scratch']
  %s0 = inlined_call_operand.hbm [shape: bf16[16,10], index: 0, kind: input, shape index: {}]
  %s1 = inlined_call_operand.hbm [shape: bf16[10,128], index: 1, kind: input, shape index: {}]
  %s2 = inlined_call_operand.vmem [shape: f32[1,128], index: 2, kind: input, shape index: {}]
  %s3 = inlined_call_operand.hbm [shape: bf16[128,128], index: 3, kind: input, shape index: {}]
  %s4 = inlined_call_operand.vmem [shape: f32[1,128], index: 4, kind: input, shape index: {}]
  %s5 = inlined_call_operand.hbm [shape: bf16[128,128], index: 5, kind: input, shape index: {}]
  %s6 = inlined_call_operand.vmem [shape: f32[1,128], index: 6, kind: input, shape index: {}]
  %s7 = inlined_call_operand.hbm [shape: bf16[128,128], index: 7, kind: input, shape index: {}]
  %s8 = inlined_call_operand.vmem [shape: f32[1,128], index: 8, kind: input, shape index: {}]
  %s9 = inlined_call_operand.hbm [shape: bf16[128,128], index: 9, kind: input, shape index: {}]
  %s10 = inlined_call_operand.hbm [shape: bf16[128,128], index: 10, kind: input, shape index: {}]
  %s11 = inlined_call_operand.vmem [shape: f32[1,128], index: 11, kind: input, shape index: {}]
  %s12 = inlined_call_operand.hbm [shape: f32[16,128], index: 12, kind: output, shape index: {}]
  %s13 = sld [smem:[#allocation0]]
  $region86: #{tpu_custom_call.1} parent=0
    _
  %s15 = ssub.s32 1, %s13
  %s16 = scalar_select 0, %s15, %s13
  $region1: #{tpu_custom_call.1} parent=0
    #allocation2 [shape = 'u8[4096]{0}', space=vmem, size = 0x1000, scoped, tag = 'input window, operand 0, single buffered']
    #allocation3 [shape = 's32[1]{0}', space=sflag, size = 0x4, scoped, tag = 'scoped memory for tpu_custom_call.1']
    #allocation4 [shape = 's32[1]{0}', space=sflag, size = 0x4, scoped, tag = 'scoped memory for tpu_custom_call.1']
    #allocation5 [shape = 'u8[4096]{0}', space=vmem, size = 0x1000, scoped, tag = 'input window, operand 1, single buffered']
    #allocation6 [shape = 's32[1]{0}', space=sflag, size = 0x4, scoped, tag = 'scoped memory for tpu_custom_call.1']
    #allocation7 [shape = 'u8[32768]{0}', space=vmem, size = 0x8000, scoped, tag = 'input window, operand 3, single buffered']
    #allocation8 [shape = 'u8[32768]{0}', space=vmem, size = 0x8000, scoped, tag = 'input window, operand 5, single buffered']
    #allocation9 [shape = 's32[1]{0}', space=sflag, size = 0x4, scoped, tag = 'scoped memory for tpu_custom_call.1']
    #allocation10 [shape = 'u8[32768]{0}', space=vmem, size = 0x8000, scoped, tag = 'input window, operand 7, single buffered']
    #allocation11 [shape = 'u8[32768]{0}', space=vmem, size = 0x8000, scoped, tag = 'input window, operand 9, single buffered']
    #allocation12 [shape = 's32[1]{0}', space=sflag, size = 0x4, scoped, tag = 'scoped memory for tpu_custom_call.1']
    #allocation13 [shape = 'u8[32768]{0}', space=vmem, size = 0x8000, scoped, tag = 'input window, operand 10, single buffered']
    #allocation14 [shape = 'u8[8192]{0}', space=vmem, size = 0x2000, scoped, tag = 'output window, operand 0, single buffered']
    %17 = vsyncpa [#allocation3], 0
    %18 = vsyncpa [#allocation6], 0
    %19 = vsyncpa [#allocation9], 0
    %20 = vsyncpa [#allocation12], 0
    %21 = vsyncpa [#allocation4], 0
    // Predicated region
    $region2: #{tpu_custom_call.1} parent=1 // pred_check
      _
    $region3: #{tpu_custom_call.1} parent=1 // pred_check_branch
      %23 = sbr.rel (0) target = $region5
    $region4: #{tpu_custom_call.1} parent=1 // pred_region
      %25 = vsyncadd [#allocation3], 0
      %s26 = sshll.u32 %s0, 4
      %s27 = int_to_ptr.hbm [resolvable:$true] %s26
      %s28 = sshll.u32 [#allocation2], 4
      %s29 = int_to_ptr.vmem [resolvable:$true] %s28
      %34 = dma.hbm_to_vmem [thread:$0]  %s27, 128, %s29, [#allocation3], 64, 64, 4
    $region5: #{tpu_custom_call.1} parent=1 // pred_fallthru
      _
    // Predicated region
    $region6: #{tpu_custom_call.1} parent=1 // pred_check
      _
    $region7: #{tpu_custom_call.1} parent=1 // pred_check_branch
      %36 = sbr.rel (0) target = $region9
    $region8: #{tpu_custom_call.1} parent=1 // pred_region
      %38 = vsyncadd [#allocation6], 0
      %s39 = sshll.u32 %s1, 4
      %s40 = int_to_ptr.hbm [resolvable:$true] %s39
      %s41 = sshll.u32 [#allocation5], 4
      %s42 = int_to_ptr.vmem [resolvable:$true] %s41
      %47 = dma.hbm_to_vmem [thread:$0]  %s40, 128, %s42, [#allocation6], 64, 64, 4
    $region9: #{tpu_custom_call.1} parent=1 // pred_fallthru
      _
    // Predicated region
    $region10: #{tpu_custom_call.1} parent=1 // pred_check
      _
    $region11: #{tpu_custom_call.1} parent=1 // pred_check_branch
      %49 = sbr.rel (0) target = $region13
    $region12: #{tpu_custom_call.1} parent=1 // pred_region
      _
    $region13: #{tpu_custom_call.1} parent=1 // pred_fallthru
      _
    // Predicated region
    $region14: #{tpu_custom_call.1} parent=1 // pred_check
      _
    $region15: #{tpu_custom_call.1} parent=1 // pred_check_branch
      %51 = sbr.rel (0) target = $region17
    $region16: #{tpu_custom_call.1} parent=1 // pred_region
      %53 = vsyncadd [#allocation6], 0
      %s54 = sshll.u32 %s3, 4
      %s55 = int_to_ptr.hbm [resolvable:$true] %s54
      %s56 = sshll.u32 [#allocation7], 4
      %s57 = int_to_ptr.vmem [resolvable:$true] %s56
      %62 = dma.hbm_to_vmem [thread:$0]  %s55, 1024, %s57, [#allocation6], 64, 64, 4
    $region17: #{tpu_custom_call.1} parent=1 // pred_fallthru
      _
    // Predicated region
    $region18: #{tpu_custom_call.1} parent=1 // pred_check
      _
    $region19: #{tpu_custom_call.1} parent=1 // pred_check_branch
      %64 = sbr.rel (0) target = $region21
    $region20: #{tpu_custom_call.1} parent=1 // pred_region
      _
    $region21: #{tpu_custom_call.1} parent=1 // pred_fallthru
      _
    // Predicated region
    $region22: #{tpu_custom_call.1} parent=1 // pred_check
      _
    $region23: #{tpu_custom_call.1} parent=1 // pred_check_branch
      %66 = sbr.rel (0) target = $region25
    $region24: #{tpu_custom_call.1} parent=1 // pred_region
      %68 = vsyncadd [#allocation9], 0
      %s69 = sshll.u32 %s5, 4
      %s70 = int_to_ptr.hbm [resolvable:$true] %s69
      %s71 = sshll.u32 [#allocation8], 4
      %s72 = int_to_ptr.vmem [resolvable:$true] %s71
      %77 = dma.hbm_to_vmem [thread:$0]  %s70, 1024, %s72, [#allocation9], 64, 64, 4
    $region25: #{tpu_custom_call.1} parent=1 // pred_fallthru
      _
    // Predicated region
    $region26: #{tpu_custom_call.1} parent=1 // pred_check
      _
    $region27: #{tpu_custom_call.1} parent=1 // pred_check_branch
      %79 = sbr.rel (0) target = $region29
    $region28: #{tpu_custom_call.1} parent=1 // pred_region
      _
    $region29: #{tpu_custom_call.1} parent=1 // pred_fallthru
      _
    // Predicated region
    $region30: #{tpu_custom_call.1} parent=1 // pred_check
      _
    $region31: #{tpu_custom_call.1} parent=1 // pred_check_branch
      %81 = sbr.rel (0) target = $region33
    $region32: #{tpu_custom_call.1} parent=1 // pred_region
      %83 = vsyncadd [#allocation9], 0
      %s84 = sshll.u32 %s7, 4
      %s85 = int_to_ptr.hbm [resolvable:$true] %s84
      %s86 = sshll.u32 [#allocation10], 4
      %s87 = int_to_ptr.vmem [resolvable:$true] %s86
      %92 = dma.hbm_to_vmem [thread:$0]  %s85, 1024, %s87, [#allocation9], 64, 64, 4
    $region33: #{tpu_custom_call.1} parent=1 // pred_fallthru
      _
    // Predicated region
    $region34: #{tpu_custom_call.1} parent=1 // pred_check
      _
    $region35: #{tpu_custom_call.1} parent=1 // pred_check_branch
      %94 = sbr.rel (0) target = $region37
    $region36: #{tpu_custom_call.1} parent=1 // pred_region
      _
    $region37: #{tpu_custom_call.1} parent=1 // pred_fallthru
      _
    // Predicated region
    $region38: #{tpu_custom_call.1} parent=1 // pred_check
      _
    $region39: #{tpu_custom_call.1} parent=1 // pred_check_branch
      %96 = sbr.rel (0) target = $region41
    $region40: #{tpu_custom_call.1} parent=1 // pred_region
      %98 = vsyncadd [#allocation12], 0
      %s99 = sshll.u32 %s9, 4
      %s100 = int_to_ptr.hbm [resolvable:$true] %s99
      %s101 = sshll.u32 [#allocation11], 4
      %s102 = int_to_ptr.vmem [resolvable:$true] %s101
      %107 = dma.hbm_to_vmem [thread:$0]  %s100, 1024, %s102, [#allocation12], 64, 64, 4
    $region41: #{tpu_custom_call.1} parent=1 // pred_fallthru
      _
    // Predicated region
    $region42: #{tpu_custom_call.1} parent=1 // pred_check
      _
    $region43: #{tpu_custom_call.1} parent=1 // pred_check_branch
      %109 = sbr.rel (0) target = $region45
    $region44: #{tpu_custom_call.1} parent=1 // pred_region
      %111 = vsyncadd [#allocation12], 0
      %s112 = sshll.u32 %s10, 4
      %s113 = int_to_ptr.hbm [resolvable:$true] %s112
      %s114 = sshll.u32 [#allocation13], 4
      %s115 = int_to_ptr.vmem [resolvable:$true] %s114
      %120 = dma.hbm_to_vmem [thread:$0]  %s113, 1024, %s115, [#allocation12], 64, 64, 4
    $region45: #{tpu_custom_call.1} parent=1 // pred_fallthru
      _
    // Predicated region
    $region46: #{tpu_custom_call.1} parent=1 // pred_check
      _
    $region47: #{tpu_custom_call.1} parent=1 // pred_check_branch
      %122 = sbr.rel (0) target = $region49
    $region48: #{tpu_custom_call.1} parent=1 // pred_region
      _
    $region49: #{tpu_custom_call.1} parent=1 // pred_fallthru
      _
    // Predicated region
    $region50: #{tpu_custom_call.1} parent=1 // pred_check
      _
    $region51: #{tpu_custom_call.1} parent=1 // pred_check_branch
      %124 = sbr.rel (0) target = $region53
    $region52: #{tpu_custom_call.1} parent=1 // pred_region
      %126 = dma.done [#allocation3], 128
    $region53: #{tpu_custom_call.1} parent=1 // pred_fallthru
      _
    // Predicated region
    $region54: #{tpu_custom_call.1} parent=1 // pred_check
      _
    $region55: #{tpu_custom_call.1} parent=1 // pred_check_branch
      %128 = sbr.rel (0) target = $region57
    $region56: #{tpu_custom_call.1} parent=1 // pred_region
      %130 = dma.done [#allocation6], 128
    $region57: #{tpu_custom_call.1} parent=1 // pred_fallthru
      _
    // Predicated region
    $region58: #{tpu_custom_call.1} parent=1 // pred_check
      _
    $region59: #{tpu_custom_call.1} parent=1 // pred_check_branch
      %132 = sbr.rel (0) target = $region61
    $region60: #{tpu_custom_call.1} parent=1 // pred_region
      %134 = dma.done [#allocation6], 1024
    $region61: #{tpu_custom_call.1} parent=1 // pred_fallthru
      _
    // Predicated region
    $region62: #{tpu_custom_call.1} parent=1 // pred_check
      _
    $region63: #{tpu_custom_call.1} parent=1 // pred_check_branch
      %136 = sbr.rel (0) target = $region65
    $region64: #{tpu_custom_call.1} parent=1 // pred_region
      %138 = dma.done [#allocation9], 1024
    $region65: #{tpu_custom_call.1} parent=1 // pred_fallthru
      _
    // Predicated region
    $region66: #{tpu_custom_call.1} parent=1 // pred_check
      _
    $region67: #{tpu_custom_call.1} parent=1 // pred_check_branch
      %140 = sbr.rel (0) target = $region69
    $region68: #{tpu_custom_call.1} parent=1 // pred_region
      %142 = dma.done [#allocation9], 1024
    $region69: #{tpu_custom_call.1} parent=1 // pred_fallthru
      _
    // Predicated region
    $region70: #{tpu_custom_call.1} parent=1 // pred_check
      _
    $region71: #{tpu_custom_call.1} parent=1 // pred_check_branch
      %144 = sbr.rel (0) target = $region73
    $region72: #{tpu_custom_call.1} parent=1 // pred_region
      %146 = dma.done [#allocation12], 1024
    $region73: #{tpu_custom_call.1} parent=1 // pred_fallthru
      _
    // Predicated region
    $region74: #{tpu_custom_call.1} parent=1 // pred_check
      _
    $region75: #{tpu_custom_call.1} parent=1 // pred_check_branch
      %148 = sbr.rel (0) target = $region77
    $region76: #{tpu_custom_call.1} parent=1 // pred_region
      %150 = dma.done [#allocation12], 1024
    $region77: #{tpu_custom_call.1} parent=1 // pred_fallthru
      _
    %v152 = vld [vmem:[#allocation2] sm:$0xf]
    %v153 = vld [vmem:[#allocation2 + $0x4] sm:$0xf]
    %v154 = vld [vmem:[#allocation5] sm:$0xf]
    %v155 = vld [vmem:[#allocation5 + $0x4] sm:$0x1]
    %v156 = vld [vmem:[%s2] sm:$0x1]
    %v158 = vperm.slane %v156, 0
    %v162 = vunpack.c.l.b16 %v152
    %v163 = vunpack.c.l.b16 %v153
    %v164 = vpack.c.b16 %v163, %v162
    %v167 = vunpack.c.l.b16 %v154
    %v168 = vunpack.c.l.b16 %v155
    %v169 = vpack.c.b16 %v168, %v167
    %vm170 = vcmask 80896
    %v172 = vsel %vm170, %v164, 0
    %vm174 = vcmask 1044480
    %v176 = vsel %vm174, %v169, 0
    %178 = vmatpush.bf16.msra.mxu0 0
    %179 = vmatpush.bf16.msra.mxu0 0
    %180 = vmatpush.bf16.msra.mxu0 0
    %181 = vmatpush.bf16.msra.mxu0 0
    %182 = vmatpush.bf16.msra.mxu0 0
    %183 = vmatpush.bf16.msra.mxu0 0
    %184 = vmatpush.bf16.msra.mxu0 0
    %185 = vmatpush.bf16.msra.mxu0 %v176
    %186 = vmatmul.bf16.gmra.mxu0 %v172
    %v187 = vpop.f32.mrf.mxu0
    %v188 = vadd.f32 %v158, %v187
    %v189 = vpop.f32.mrf.mxu0
    %v190 = vadd.f32 %v158, %v189
    %191 = vdwg.mxu0
    %v192 = vpack.c.bf16 %v190, %v188
    %v193 = vld [vmem:[#allocation7] sm:$0xf]
    %v194 = vld [vmem:[#allocation7 + $0x4] sm:$0xf]
    %v195 = vld [vmem:[#allocation7 + $0x8] sm:$0xf]
    %v196 = vld [vmem:[#allocation7 + $0xc] sm:$0xf]
    %v197 = vld [vmem:[#allocation7 + $0x10] sm:$0xf]
    %v198 = vld [vmem:[#allocation7 + $0x14] sm:$0xf]
    %v199 = vld [vmem:[#allocation7 + $0x18] sm:$0xf]
    %v200 = vld [vmem:[#allocation7 + $0x1c] sm:$0xf]
    %v201 = vld [vmem:[#allocation7 + $0x20] sm:$0xf]
    %v202 = vld [vmem:[#allocation7 + $0x24] sm:$0xf]
    %v203 = vld [vmem:[#allocation7 + $0x28] sm:$0xf]
    %v204 = vld [vmem:[#allocation7 + $0x2c] sm:$0xf]
    %v205 = vld [vmem:[#allocation7 + $0x30] sm:$0xf]
    %v206 = vld [vmem:[#allocation7 + $0x34] sm:$0xf]
    %v207 = vld [vmem:[#allocation7 + $0x38] sm:$0xf]
    %v208 = vld [vmem:[#allocation7 + $0x3c] sm:$0xf]
    %v209 = vld [vmem:[%s4] sm:$0x1]
    %v211 = vperm.slane %v209, 0
    %v229 = vunpack.c.l.b16 %v193
    %v230 = vunpack.c.l.b16 %v194
    %v231 = vunpack.c.l.b16 %v195
    %v232 = vunpack.c.l.b16 %v196
    %v233 = vunpack.c.l.b16 %v197
    %v234 = vunpack.c.l.b16 %v198
    %v235 = vunpack.c.l.b16 %v199
    %v236 = vunpack.c.l.b16 %v200
    %v237 = vunpack.c.l.b16 %v201
    %v238 = vunpack.c.l.b16 %v202
    %v239 = vunpack.c.l.b16 %v203
    %v240 = vunpack.c.l.b16 %v204
    %v241 = vunpack.c.l.b16 %v205
    %v242 = vunpack.c.l.b16 %v206
    %v243 = vunpack.c.l.b16 %v207
    %v244 = vunpack.c.l.b16 %v208
    %v245 = vpack.c.b16 %v230, %v229
    %v246 = vpack.c.b16 %v232, %v231
    %v247 = vpack.c.b16 %v234, %v233
    %v248 = vpack.c.b16 %v236, %v235
    %v249 = vpack.c.b16 %v238, %v237
    %v250 = vpack.c.b16 %v240, %v239
    %v251 = vpack.c.b16 %v242, %v241
    %v252 = vpack.c.b16 %v244, %v243
    %261 = vmatpush.bf16.msra.mxu0 %v252
    %262 = vmatpush.bf16.msra.mxu0 %v251
    %263 = vmatpush.bf16.msra.mxu0 %v250
    %264 = vmatpush.bf16.msra.mxu0 %v249
    %265 = vmatpush.bf16.msra.mxu0 %v248
    %266 = vmatpush.bf16.msra.mxu0 %v247
    %267 = vmatpush.bf16.msra.mxu0 %v246
    %268 = vmatpush.bf16.msra.mxu0 %v245
    %269 = vmatmul.bf16.gmra.mxu0 %v192
    %v270 = vpop.f32.mrf.mxu0
    %v271 = vadd.f32 %v211, %v270
    %v272 = vpop.f32.mrf.mxu0
    %v273 = vadd.f32 %v211, %v272
    %274 = vdwg.mxu0
    %v275 = vmax.f32 %v271, 0.0
    %v276 = vmax.f32 %v273, 0.0
    %v277 = vpack.c.bf16 %v276, %v275
    %v278 = vld [vmem:[#allocation8] sm:$0xf]
    %v279 = vld [vmem:[#allocation8 + $0x4] sm:$0xf]
    %v280 = vld [vmem:[#allocation8 + $0x8] sm:$0xf]
    %v281 = vld [vmem:[#allocation8 + $0xc] sm:$0xf]
    %v282 = vld [vmem:[#allocation8 + $0x10] sm:$0xf]
    %v283 = vld [vmem:[#allocation8 + $0x14] sm:$0xf]
    %v284 = vld [vmem:[#allocation8 + $0x18] sm:$0xf]
    %v285 = vld [vmem:[#allocation8 + $0x1c] sm:$0xf]
    %v286 = vld [vmem:[#allocation8 + $0x20] sm:$0xf]
    %v287 = vld [vmem:[#allocation8 + $0x24] sm:$0xf]
    %v288 = vld [vmem:[#allocation8 + $0x28] sm:$0xf]
    %v289 = vld [vmem:[#allocation8 + $0x2c] sm:$0xf]
    %v290 = vld [vmem:[#allocation8 + $0x30] sm:$0xf]
    %v291 = vld [vmem:[#allocation8 + $0x34] sm:$0xf]
    %v292 = vld [vmem:[#allocation8 + $0x38] sm:$0xf]
    %v293 = vld [vmem:[#allocation8 + $0x3c] sm:$0xf]
    %v294 = vld [vmem:[%s6] sm:$0x1]
    %v296 = vperm.slane %v294, 0
    %v314 = vunpack.c.l.b16 %v278
    %v315 = vunpack.c.l.b16 %v279
    %v316 = vunpack.c.l.b16 %v280
    %v317 = vunpack.c.l.b16 %v281
    %v318 = vunpack.c.l.b16 %v282
    %v319 = vunpack.c.l.b16 %v283
    %v320 = vunpack.c.l.b16 %v284
    %v321 = vunpack.c.l.b16 %v285
    %v322 = vunpack.c.l.b16 %v286
    %v323 = vunpack.c.l.b16 %v287
    %v324 = vunpack.c.l.b16 %v288
    %v325 = vunpack.c.l.b16 %v289
    %v326 = vunpack.c.l.b16 %v290
    %v327 = vunpack.c.l.b16 %v291
    %v328 = vunpack.c.l.b16 %v292
    %v329 = vunpack.c.l.b16 %v293
    %v330 = vpack.c.b16 %v315, %v314
    %v331 = vpack.c.b16 %v317, %v316
    %v332 = vpack.c.b16 %v319, %v318
    %v333 = vpack.c.b16 %v321, %v320
    %v334 = vpack.c.b16 %v323, %v322
    %v335 = vpack.c.b16 %v325, %v324
    %v336 = vpack.c.b16 %v327, %v326
    %v337 = vpack.c.b16 %v329, %v328
    %346 = vmatpush.bf16.msra.mxu0 %v337
    %347 = vmatpush.bf16.msra.mxu0 %v336
    %348 = vmatpush.bf16.msra.mxu0 %v335
    %349 = vmatpush.bf16.msra.mxu0 %v334
    %350 = vmatpush.bf16.msra.mxu0 %v333
    %351 = vmatpush.bf16.msra.mxu0 %v332
    %352 = vmatpush.bf16.msra.mxu0 %v331
    %353 = vmatpush.bf16.msra.mxu0 %v330
    %354 = vmatmul.bf16.gmra.mxu0 %v277
    %v355 = vpop.f32.mrf.mxu0
    %v356 = vadd.f32 %v296, %v355
    %v357 = vpop.f32.mrf.mxu0
    %v358 = vadd.f32 %v296, %v357
    %359 = vdwg.mxu0
    %v360 = vmax.f32 %v356, 0.0
    %v361 = vmax.f32 %v358, 0.0
    %v362 = vpack.c.bf16 %v361, %v360
    %v363 = vld [vmem:[#allocation10] sm:$0xf]
    %v364 = vld [vmem:[#allocation10 + $0x4] sm:$0xf]
    %v365 = vld [vmem:[#allocation10 + $0x8] sm:$0xf]
    %v366 = vld [vmem:[#allocation10 + $0xc] sm:$0xf]
    %v367 = vld [vmem:[#allocation10 + $0x10] sm:$0xf]
    %v368 = vld [vmem:[#allocation10 + $0x14] sm:$0xf]
    %v369 = vld [vmem:[#allocation10 + $0x18] sm:$0xf]
    %v370 = vld [vmem:[#allocation10 + $0x1c] sm:$0xf]
    %v371 = vld [vmem:[#allocation10 + $0x20] sm:$0xf]
    %v372 = vld [vmem:[#allocation10 + $0x24] sm:$0xf]
    %v373 = vld [vmem:[#allocation10 + $0x28] sm:$0xf]
    %v374 = vld [vmem:[#allocation10 + $0x2c] sm:$0xf]
    %v375 = vld [vmem:[#allocation10 + $0x30] sm:$0xf]
    %v376 = vld [vmem:[#allocation10 + $0x34] sm:$0xf]
    %v377 = vld [vmem:[#allocation10 + $0x38] sm:$0xf]
    %v378 = vld [vmem:[#allocation10 + $0x3c] sm:$0xf]
    %v379 = vld [vmem:[%s8] sm:$0x1]
    %v381 = vperm.slane %v379, 0
    %v399 = vunpack.c.l.b16 %v363
    %v400 = vunpack.c.l.b16 %v364
    %v401 = vunpack.c.l.b16 %v365
    %v402 = vunpack.c.l.b16 %v366
    %v403 = vunpack.c.l.b16 %v367
    %v404 = vunpack.c.l.b16 %v368
    %v405 = vunpack.c.l.b16 %v369
    %v406 = vunpack.c.l.b16 %v370
    %v407 = vunpack.c.l.b16 %v371
    %v408 = vunpack.c.l.b16 %v372
    %v409 = vunpack.c.l.b16 %v373
    %v410 = vunpack.c.l.b16 %v374
    %v411 = vunpack.c.l.b16 %v375
    %v412 = vunpack.c.l.b16 %v376
    %v413 = vunpack.c.l.b16 %v377
    %v414 = vunpack.c.l.b16 %v378
    %v415 = vpack.c.b16 %v400, %v399
    %v416 = vpack.c.b16 %v402, %v401
    %v417 = vpack.c.b16 %v404, %v403
    %v418 = vpack.c.b16 %v406, %v405
    %v419 = vpack.c.b16 %v408, %v407
    %v420 = vpack.c.b16 %v410, %v409
    %v421 = vpack.c.b16 %v412, %v411
    %v422 = vpack.c.b16 %v414, %v413
    %431 = vmatpush.bf16.msra.mxu0 %v422
    %432 = vmatpush.bf16.msra.mxu0 %v421
    %433 = vmatpush.bf16.msra.mxu0 %v420
    %434 = vmatpush.bf16.msra.mxu0 %v419
    %435 = vmatpush.bf16.msra.mxu0 %v418
    %436 = vmatpush.bf16.msra.mxu0 %v417
    %437 = vmatpush.bf16.msra.mxu0 %v416
    %438 = vmatpush.bf16.msra.mxu0 %v415
    %439 = vmatmul.bf16.gmra.mxu0 %v362
    %v440 = vpop.f32.mrf.mxu0
    %v441 = vadd.f32 %v381, %v440
    %v442 = vpop.f32.mrf.mxu0
    %v443 = vadd.f32 %v381, %v442
    %444 = vdwg.mxu0
    %v445 = vmax.f32 %v441, 0.0
    %v446 = vmax.f32 %v443, 0.0
    %v447 = vpack.c.bf16 %v446, %v445
    %v448 = vld [vmem:[#allocation11] sm:$0xf]
    %v449 = vld [vmem:[#allocation11 + $0x4] sm:$0xf]
    %v450 = vld [vmem:[#allocation11 + $0x8] sm:$0xf]
    %v451 = vld [vmem:[#allocation11 + $0xc] sm:$0xf]
    %v452 = vld [vmem:[#allocation11 + $0x10] sm:$0xf]
    %v453 = vld [vmem:[#allocation11 + $0x14] sm:$0xf]
    %v454 = vld [vmem:[#allocation11 + $0x18] sm:$0xf]
    %v455 = vld [vmem:[#allocation11 + $0x1c] sm:$0xf]
    %v456 = vld [vmem:[#allocation11 + $0x20] sm:$0xf]
    %v457 = vld [vmem:[#allocation11 + $0x24] sm:$0xf]
    %v458 = vld [vmem:[#allocation11 + $0x28] sm:$0xf]
    %v459 = vld [vmem:[#allocation11 + $0x2c] sm:$0xf]
    %v460 = vld [vmem:[#allocation11 + $0x30] sm:$0xf]
    %v461 = vld [vmem:[#allocation11 + $0x34] sm:$0xf]
    %v462 = vld [vmem:[#allocation11 + $0x38] sm:$0xf]
    %v463 = vld [vmem:[#allocation11 + $0x3c] sm:$0xf]
    %v480 = vunpack.c.l.b16 %v448
    %v481 = vunpack.c.l.b16 %v449
    %v482 = vunpack.c.l.b16 %v450
    %v483 = vunpack.c.l.b16 %v451
    %v484 = vunpack.c.l.b16 %v452
    %v485 = vunpack.c.l.b16 %v453
    %v486 = vunpack.c.l.b16 %v454
    %v487 = vunpack.c.l.b16 %v455
    %v488 = vunpack.c.l.b16 %v456
    %v489 = vunpack.c.l.b16 %v457
    %v490 = vunpack.c.l.b16 %v458
    %v491 = vunpack.c.l.b16 %v459
    %v492 = vunpack.c.l.b16 %v460
    %v493 = vunpack.c.l.b16 %v461
    %v494 = vunpack.c.l.b16 %v462
    %v495 = vunpack.c.l.b16 %v463
    %v496 = vpack.c.b16 %v481, %v480
    %v497 = vpack.c.b16 %v483, %v482
    %v498 = vpack.c.b16 %v485, %v484
    %v499 = vpack.c.b16 %v487, %v486
    %v500 = vpack.c.b16 %v489, %v488
    %v501 = vpack.c.b16 %v491, %v490
    %v502 = vpack.c.b16 %v493, %v492
    %v503 = vpack.c.b16 %v495, %v494
    %512 = vmatpush.bf16.msra.mxu0 %v503
    %513 = vmatpush.bf16.msra.mxu0 %v502
    %514 = vmatpush.bf16.msra.mxu0 %v501
    %515 = vmatpush.bf16.msra.mxu0 %v500
    %516 = vmatpush.bf16.msra.mxu0 %v499
    %517 = vmatpush.bf16.msra.mxu0 %v498
    %518 = vmatpush.bf16.msra.mxu0 %v497
    %519 = vmatpush.bf16.msra.mxu0 %v496
    %520 = vmatmul.bf16.gmra.mxu0 %v447
    %v521 = vpop.f32.mrf.mxu0
    %v522 = vadd.f32 0.0, %v521
    %v523 = vpop.f32.mrf.mxu0
    %v524 = vadd.f32 0.0, %v523
    %525 = vdwg.mxu0
    %v526 = vpack.c.bf16 %v524, %v522
    %v527 = vld [vmem:[#allocation13] sm:$0xf]
    %v528 = vld [vmem:[#allocation13 + $0x4] sm:$0xf]
    %v529 = vld [vmem:[#allocation13 + $0x8] sm:$0xf]
    %v530 = vld [vmem:[#allocation13 + $0xc] sm:$0xf]
    %v531 = vld [vmem:[#allocation13 + $0x10] sm:$0xf]
    %v532 = vld [vmem:[#allocation13 + $0x14] sm:$0xf]
    %v533 = vld [vmem:[#allocation13 + $0x18] sm:$0xf]
    %v534 = vld [vmem:[#allocation13 + $0x1c] sm:$0xf]
    %v535 = vld [vmem:[#allocation13 + $0x20] sm:$0xf]
    %v536 = vld [vmem:[#allocation13 + $0x24] sm:$0xf]
    %v537 = vld [vmem:[#allocation13 + $0x28] sm:$0xf]
    %v538 = vld [vmem:[#allocation13 + $0x2c] sm:$0xf]
    %v539 = vld [vmem:[#allocation13 + $0x30] sm:$0xf]
    %v540 = vld [vmem:[#allocation13 + $0x34] sm:$0xf]
    %v541 = vld [vmem:[#allocation13 + $0x38] sm:$0xf]
    %v542 = vld [vmem:[#allocation13 + $0x3c] sm:$0xf]
    %v543 = vld [vmem:[%s11] sm:$0x1]
    %v545 = vperm.slane %v543, 0
    %v563 = vunpack.c.l.b16 %v527
    %v564 = vunpack.c.l.b16 %v528
    %v565 = vunpack.c.l.b16 %v529
    %v566 = vunpack.c.l.b16 %v530
    %v567 = vunpack.c.l.b16 %v531
    %v568 = vunpack.c.l.b16 %v532
    %v569 = vunpack.c.l.b16 %v533
    %v570 = vunpack.c.l.b16 %v534
    %v571 = vunpack.c.l.b16 %v535
    %v572 = vunpack.c.l.b16 %v536
    %v573 = vunpack.c.l.b16 %v537
    %v574 = vunpack.c.l.b16 %v538
    %v575 = vunpack.c.l.b16 %v539
    %v576 = vunpack.c.l.b16 %v540
    %v577 = vunpack.c.l.b16 %v541
    %v578 = vunpack.c.l.b16 %v542
    %v579 = vpack.c.b16 %v564, %v563
    %v580 = vpack.c.b16 %v566, %v565
    %v581 = vpack.c.b16 %v568, %v567
    %v582 = vpack.c.b16 %v570, %v569
    %v583 = vpack.c.b16 %v572, %v571
    %v584 = vpack.c.b16 %v574, %v573
    %v585 = vpack.c.b16 %v576, %v575
    %v586 = vpack.c.b16 %v578, %v577
    %595 = vmatpush.bf16.msra.mxu0 %v586
    %596 = vmatpush.bf16.msra.mxu0 %v585
    %597 = vmatpush.bf16.msra.mxu0 %v584
    %598 = vmatpush.bf16.msra.mxu0 %v583
    %599 = vmatpush.bf16.msra.mxu0 %v582
    %600 = vmatpush.bf16.msra.mxu0 %v581
    %601 = vmatpush.bf16.msra.mxu0 %v580
    %602 = vmatpush.bf16.msra.mxu0 %v579
    %603 = vmatmul.bf16.gmra.mxu0 %v526
    %v604 = vpop.f32.mrf.mxu0
    %v605 = vadd.f32 %v545, %v604
    %v606 = vpop.f32.mrf.mxu0
    %v607 = vadd.f32 %v545, %v606
    %608 = vdwg.mxu0
    %609 = vst [vmem:[#allocation14] sm:$0xff] %v605
    %610 = vst [vmem:[#allocation14 + $0x8] sm:$0xff] %v607
    // Predicated region
    $region78: #{tpu_custom_call.1} parent=1 // pred_check
      _
    $region79: #{tpu_custom_call.1} parent=1 // pred_check_branch
      %612 = sbr.rel (0) target = $region81
    $region80: #{tpu_custom_call.1} parent=1 // pred_region
      %614 = vsyncadd [#allocation4], 0
      %s615 = sshll.u32 [#allocation14], 4
      %s616 = int_to_ptr.vmem [resolvable:$true] %s615
      %s617 = sshll.u32 %s12, 4
      %s618 = int_to_ptr.hbm [resolvable:$true] %s617
      %623 = dma.vmem_to_hbm [thread:$0]  %s616, 256, %s618, [#allocation4], 128, 128, 8
    $region81: #{tpu_custom_call.1} parent=1 // pred_fallthru
      _
    // Predicated region
    $region82: #{tpu_custom_call.1} parent=1 // pred_check
      _
    $region83: #{tpu_custom_call.1} parent=1 // pred_check_branch
      %625 = sbr.rel (0) target = $region85
    $region84: #{tpu_custom_call.1} parent=1 // pred_region
      %627 = dma.done [#allocation4], 256
    $region85: #{tpu_custom_call.1} parent=1 // pred_fallthru
      _
    %628 = vsyncpa [#allocation3], 1
    %629 = vsyncpa [#allocation6], 1
    %630 = vsyncpa [#allocation9], 1
    %631 = vsyncpa [#allocation12], 1
    %632 = vsyncpa [#allocation4], 1

// kernel: tpu_custom_call.1
$region0: #{tpu_custom_call.1}
  #allocation0 [shape = 'u32[]', space=smem, size = 0x4, offset = 0x4, fixed_abs, tag = 'smem constant byte address 0x4 - core index']
  #allocation1 [shape = 'u32[72,128]{1,0:T(1,128)}', space=vmem, size = 0x9000, scoped, tag = 'internal scratch']
  %s0 = inlined_call_operand.hbm [shape: bf16[16,10], index: 0, kind: input, shape index: {}]
  %s1 = inlined_call_operand.hbm [shape: bf16[10,128], index: 1, kind: input, shape index: {}]
  %s2 = inlined_call_operand.vmem [shape: f32[1,128], index: 2, kind: input, shape index: {}]
  %s3 = inlined_call_operand.hbm [shape: bf16[128,128], index: 3, kind: input, shape index: {}]
  %s4 = inlined_call_operand.vmem [shape: f32[1,128], index: 4, kind: input, shape index: {}]
  %s5 = inlined_call_operand.hbm [shape: bf16[128,128], index: 5, kind: input, shape index: {}]
  %s6 = inlined_call_operand.vmem [shape: f32[1,128], index: 6, kind: input, shape index: {}]
  %s7 = inlined_call_operand.hbm [shape: bf16[128,128], index: 7, kind: input, shape index: {}]
  %s8 = inlined_call_operand.vmem [shape: f32[1,128], index: 8, kind: input, shape index: {}]
  %s9 = inlined_call_operand.hbm [shape: bf16[128,128], index: 9, kind: input, shape index: {}]
  %s10 = inlined_call_operand.hbm [shape: bf16[128,128], index: 10, kind: input, shape index: {}]
  %s11 = inlined_call_operand.vmem [shape: f32[1,128], index: 11, kind: input, shape index: {}]
  %s12 = inlined_call_operand.hbm [shape: f32[16,128], index: 12, kind: output, shape index: {}]
  %s13 = sld [smem:[#allocation0]]
  $region86: #{tpu_custom_call.1} parent=0
    _
  %s15 = ssub.s32 1, %s13
  %s16 = scalar_select 0, %s15, %s13
  $region1: #{tpu_custom_call.1} parent=0
    #allocation2 [shape = 'u8[4096]{0}', space=vmem, size = 0x1000, scoped, tag = 'input window, operand 0, single buffered']
    #allocation3 [shape = 's32[1]{0}', space=sflag, size = 0x4, scoped, tag = 'scoped memory for tpu_custom_call.1']
    #allocation4 [shape = 's32[1]{0}', space=sflag, size = 0x4, scoped, tag = 'scoped memory for tpu_custom_call.1']
    #allocation5 [shape = 'u8[4096]{0}', space=vmem, size = 0x1000, scoped, tag = 'input window, operand 1, single buffered']
    #allocation6 [shape = 's32[1]{0}', space=sflag, size = 0x4, scoped, tag = 'scoped memory for tpu_custom_call.1']
    #allocation7 [shape = 'u8[32768]{0}', space=vmem, size = 0x8000, scoped, tag = 'input window, operand 3, single buffered']
    #allocation8 [shape = 'u8[32768]{0}', space=vmem, size = 0x8000, scoped, tag = 'input window, operand 5, single buffered']
    #allocation9 [shape = 's32[1]{0}', space=sflag, size = 0x4, scoped, tag = 'scoped memory for tpu_custom_call.1']
    #allocation10 [shape = 'u8[32768]{0}', space=vmem, size = 0x8000, scoped, tag = 'input window, operand 7, single buffered']
    #allocation11 [shape = 'u8[32768]{0}', space=vmem, size = 0x8000, scoped, tag = 'input window, operand 9, single buffered']
    #allocation12 [shape = 's32[1]{0}', space=sflag, size = 0x4, scoped, tag = 'scoped memory for tpu_custom_call.1']
    #allocation13 [shape = 'u8[32768]{0}', space=vmem, size = 0x8000, scoped, tag = 'input window, operand 10, single buffered']
    #allocation14 [shape = 'u8[8192]{0}', space=vmem, size = 0x2000, scoped, tag = 'output window, operand 0, single buffered']
    %17 = vsyncpa [#allocation3], 0
    %18 = vsyncpa [#allocation6], 0
    %19 = vsyncpa [#allocation9], 0
    %20 = vsyncpa [#allocation12], 0
    %21 = vsyncpa [#allocation4], 0
    // Predicated region
    $region2: #{tpu_custom_call.1} parent=1 // pred_check
      _
    $region3: #{tpu_custom_call.1} parent=1 // pred_check_branch
      %23 = sbr.rel (0) target = $region5
    $region4: #{tpu_custom_call.1} parent=1 // pred_region
      %25 = vsyncadd [#allocation3], 0
      %s26 = sshll.u32 %s0, 4
      %s27 = int_to_ptr.hbm [resolvable:$true] %s26
      %s28 = sshll.u32 [#allocation2], 4
      %s29 = int_to_ptr.vmem [resolvable:$true] %s28
      %34 = dma.hbm_to_vmem [thread:$0]  %s27, 128, %s29, [#allocation3], 64, 64, 4
    $region5: #{tpu_custom_call.1} parent=1 // pred_fallthru
      _
    // Predicated region
    $region6: #{tpu_custom_call.1} parent=1 // pred_check
      _
    $region7: #{tpu_custom_call.1} parent=1 // pred_check_branch
      %36 = sbr.rel (0) target = $region9
    $region8: #{tpu_custom_call.1} parent=1 // pred_region
      %38 = vsyncadd [#allocation6], 0
      %s39 = sshll.u32 %s1, 4
      %s40 = int_to_ptr.hbm [resolvable:$true] %s39
      %s41 = sshll.u32 [#allocation5], 4
      %s42 = int_to_ptr.vmem [resolvable:$true] %s41
      %47 = dma.hbm_to_vmem [thread:$0]  %s40, 128, %s42, [#allocation6], 64, 64, 4
    $region9: #{tpu_custom_call.1} parent=1 // pred_fallthru
      _
    // Predicated region
    $region10: #{tpu_custom_call.1} parent=1 // pred_check
      _
    $region11: #{tpu_custom_call.1} parent=1 // pred_check_branch
      %49 = sbr.rel (0) target = $region13
    $region12: #{tpu_custom_call.1} parent=1 // pred_region
      _
    $region13: #{tpu_custom_call.1} parent=1 // pred_fallthru
      _
    // Predicated region
    $region14: #{tpu_custom_call.1} parent=1 // pred_check
      _
    $region15: #{tpu_custom_call.1} parent=1 // pred_check_branch
      %51 = sbr.rel (0) target = $region17
    $region16: #{tpu_custom_call.1} parent=1 // pred_region
      %53 = vsyncadd [#allocation6], 0
      %s54 = sshll.u32 %s3, 4
      %s55 = int_to_ptr.hbm [resolvable:$true] %s54
      %s56 = sshll.u32 [#allocation7], 4
      %s57 = int_to_ptr.vmem [resolvable:$true] %s56
      %62 = dma.hbm_to_vmem [thread:$0]  %s55, 1024, %s57, [#allocation6], 64, 64, 4
    $region17: #{tpu_custom_call.1} parent=1 // pred_fallthru
      _
    // Predicated region
    $region18: #{tpu_custom_call.1} parent=1 // pred_check
      _
    $region19: #{tpu_custom_call.1} parent=1 // pred_check_branch
      %64 = sbr.rel (0) target = $region21
    $region20: #{tpu_custom_call.1} parent=1 // pred_region
      _
    $region21: #{tpu_custom_call.1} parent=1 // pred_fallthru
      _
    // Predicated region
    $region22: #{tpu_custom_call.1} parent=1 // pred_check
      _
    $region23: #{tpu_custom_call.1} parent=1 // pred_check_branch
      %66 = sbr.rel (0) target = $region25
    $region24: #{tpu_custom_call.1} parent=1 // pred_region
      %68 = vsyncadd [#allocation9], 0
      %s69 = sshll.u32 %s5, 4
      %s70 = int_to_ptr.hbm [resolvable:$true] %s69
      %s71 = sshll.u32 [#allocation8], 4
      %s72 = int_to_ptr.vmem [resolvable:$true] %s71
      %77 = dma.hbm_to_vmem [thread:$0]  %s70, 1024, %s72, [#allocation9], 64, 64, 4
    $region25: #{tpu_custom_call.1} parent=1 // pred_fallthru
      _
    // Predicated region
    $region26: #{tpu_custom_call.1} parent=1 // pred_check
      _
    $region27: #{tpu_custom_call.1} parent=1 // pred_check_branch
      %79 = sbr.rel (0) target = $region29
    $region28: #{tpu_custom_call.1} parent=1 // pred_region
      _
    $region29: #{tpu_custom_call.1} parent=1 // pred_fallthru
      _
    // Predicated region
    $region30: #{tpu_custom_call.1} parent=1 // pred_check
      _
    $region31: #{tpu_custom_call.1} parent=1 // pred_check_branch
      %81 = sbr.rel (0) target = $region33
    $region32: #{tpu_custom_call.1} parent=1 // pred_region
      %83 = vsyncadd [#allocation9], 0
      %s84 = sshll.u32 %s7, 4
      %s85 = int_to_ptr.hbm [resolvable:$true] %s84
      %s86 = sshll.u32 [#allocation10], 4
      %s87 = int_to_ptr.vmem [resolvable:$true] %s86
      %92 = dma.hbm_to_vmem [thread:$0]  %s85, 1024, %s87, [#allocation9], 64, 64, 4
    $region33: #{tpu_custom_call.1} parent=1 // pred_fallthru
      _
    // Predicated region
    $region34: #{tpu_custom_call.1} parent=1 // pred_check
      _
    $region35: #{tpu_custom_call.1} parent=1 // pred_check_branch
      %94 = sbr.rel (0) target = $region37
    $region36: #{tpu_custom_call.1} parent=1 // pred_region
      _
    $region37: #{tpu_custom_call.1} parent=1 // pred_fallthru
      _
    // Predicated region
    $region38: #{tpu_custom_call.1} parent=1 // pred_check
      _
    $region39: #{tpu_custom_call.1} parent=1 // pred_check_branch
      %96 = sbr.rel (0) target = $region41
    $region40: #{tpu_custom_call.1} parent=1 // pred_region
      %98 = vsyncadd [#allocation12], 0
      %s99 = sshll.u32 %s9, 4
      %s100 = int_to_ptr.hbm [resolvable:$true] %s99
      %s101 = sshll.u32 [#allocation11], 4
      %s102 = int_to_ptr.vmem [resolvable:$true] %s101
      %107 = dma.hbm_to_vmem [thread:$0]  %s100, 1024, %s102, [#allocation12], 64, 64, 4
    $region41: #{tpu_custom_call.1} parent=1 // pred_fallthru
      _
    // Predicated region
    $region42: #{tpu_custom_call.1} parent=1 // pred_check
      _
    $region43: #{tpu_custom_call.1} parent=1 // pred_check_branch
      %109 = sbr.rel (0) target = $region45
    $region44: #{tpu_custom_call.1} parent=1 // pred_region
      %111 = vsyncadd [#allocation12], 0
      %s112 = sshll.u32 %s10, 4
      %s113 = int_to_ptr.hbm [resolvable:$true] %s112
      %s114 = sshll.u32 [#allocation13], 4
      %s115 = int_to_ptr.vmem [resolvable:$true] %s114
      %120 = dma.hbm_to_vmem [thread:$0]  %s113, 1024, %s115, [#allocation12], 64, 64, 4
    $region45: #{tpu_custom_call.1} parent=1 // pred_fallthru
      _
    // Predicated region
    $region46: #{tpu_custom_call.1} parent=1 // pred_check
      _
    $region47: #{tpu_custom_call.1} parent=1 // pred_check_branch
      %122 = sbr.rel (0) target = $region49
    $region48: #{tpu_custom_call.1} parent=1 // pred_region
      _
    $region49: #{tpu_custom_call.1} parent=1 // pred_fallthru
      _
    // Predicated region
    $region50: #{tpu_custom_call.1} parent=1 // pred_check
      _
    $region51: #{tpu_custom_call.1} parent=1 // pred_check_branch
      %124 = sbr.rel (0) target = $region53
    $region52: #{tpu_custom_call.1} parent=1 // pred_region
      %126 = dma.done [#allocation3], 128
    $region53: #{tpu_custom_call.1} parent=1 // pred_fallthru
      _
    // Predicated region
    $region54: #{tpu_custom_call.1} parent=1 // pred_check
      _
    $region55: #{tpu_custom_call.1} parent=1 // pred_check_branch
      %128 = sbr.rel (0) target = $region57
    $region56: #{tpu_custom_call.1} parent=1 // pred_region
      %130 = dma.done [#allocation6], 128
    $region57: #{tpu_custom_call.1} parent=1 // pred_fallthru
      _
    // Predicated region
    $region58: #{tpu_custom_call.1} parent=1 // pred_check
      _
    $region59: #{tpu_custom_call.1} parent=1 // pred_check_branch
      %132 = sbr.rel (0) target = $region61
    $region60: #{tpu_custom_call.1} parent=1 // pred_region
      %134 = dma.done [#allocation6], 1024
    $region61: #{tpu_custom_call.1} parent=1 // pred_fallthru
      _
    // Predicated region
    $region62: #{tpu_custom_call.1} parent=1 // pred_check
      _
    $region63: #{tpu_custom_call.1} parent=1 // pred_check_branch
      %136 = sbr.rel (0) target = $region65
    $region64: #{tpu_custom_call.1} parent=1 // pred_region
      %138 = dma.done [#allocation9], 1024
    $region65: #{tpu_custom_call.1} parent=1 // pred_fallthru
      _
    // Predicated region
    $region66: #{tpu_custom_call.1} parent=1 // pred_check
      _
    $region67: #{tpu_custom_call.1} parent=1 // pred_check_branch
      %140 = sbr.rel (0) target = $region69
    $region68: #{tpu_custom_call.1} parent=1 // pred_region
      %142 = dma.done [#allocation9], 1024
    $region69: #{tpu_custom_call.1} parent=1 // pred_fallthru
      _
    // Predicated region
    $region70: #{tpu_custom_call.1} parent=1 // pred_check
      _
    $region71: #{tpu_custom_call.1} parent=1 // pred_check_branch
      %144 = sbr.rel (0) target = $region73
    $region72: #{tpu_custom_call.1} parent=1 // pred_region
      %146 = dma.done [#allocation12], 1024
    $region73: #{tpu_custom_call.1} parent=1 // pred_fallthru
      _
    // Predicated region
    $region74: #{tpu_custom_call.1} parent=1 // pred_check
      _
    $region75: #{tpu_custom_call.1} parent=1 // pred_check_branch
      %148 = sbr.rel (0) target = $region77
    $region76: #{tpu_custom_call.1} parent=1 // pred_region
      %150 = dma.done [#allocation12], 1024
    $region77: #{tpu_custom_call.1} parent=1 // pred_fallthru
      _
    %v152 = vld [vmem:[#allocation2] sm:$0xf]
    %v153 = vld [vmem:[#allocation2 + $0x4] sm:$0xf]
    %v154 = vld [vmem:[#allocation5] sm:$0xf]
    %v155 = vld [vmem:[#allocation5 + $0x4] sm:$0x1]
    %v156 = vld [vmem:[%s2] sm:$0x1]
    %v158 = vperm.slane %v156, 0
    %v162 = vunpack.c.l.b16 %v152
    %v163 = vunpack.c.l.b16 %v153
    %v164 = vpack.c.b16 %v163, %v162
    %v167 = vunpack.c.l.b16 %v154
    %v168 = vunpack.c.l.b16 %v155
    %v169 = vpack.c.b16 %v168, %v167
    %vm170 = vcmask 80896
    %v172 = vsel %vm170, %v164, 0
    %vm174 = vcmask 1044480
    %v176 = vsel %vm174, %v169, 0
    %178 = vmatpush.bf16.msra.mxu0 0
    %179 = vmatpush.bf16.msra.mxu0 0
    %180 = vmatpush.bf16.msra.mxu0 0
    %181 = vmatpush.bf16.msra.mxu0 0
    %182 = vmatpush.bf16.msra.mxu0 0
    %183 = vmatpush.bf16.msra.mxu0 0
    %184 = vmatpush.bf16.msra.mxu0 0
    %185 = vmatpush.bf16.msra.mxu0 %v176
    %186 = vmatmul.bf16.gmra.mxu0 %v172
    %v187 = vpop.f32.mrf.mxu0
    %v188 = vadd.f32 %v158, %v187
    %v189 = vpop.f32.mrf.mxu0
    %v190 = vadd.f32 %v158, %v189
    %191 = vdwg.mxu0
    %v192 = vpack.c.bf16 %v190, %v188
    %v193 = vld [vmem:[#allocation7] sm:$0xf]
    %v194 = vld [vmem:[#allocation7 + $0x4] sm:$0xf]
    %v195 = vld [vmem:[#allocation7 + $0x8] sm:$0xf]
    %v196 = vld [vmem:[#allocation7 + $0xc] sm:$0xf]
    %v197 = vld [vmem:[#allocation7 + $0x10] sm:$0xf]
    %v198 = vld [vmem:[#allocation7 + $0x14] sm:$0xf]
    %v199 = vld [vmem:[#allocation7 + $0x18] sm:$0xf]
    %v200 = vld [vmem:[#allocation7 + $0x1c] sm:$0xf]
    %v201 = vld [vmem:[#allocation7 + $0x20] sm:$0xf]
    %v202 = vld [vmem:[#allocation7 + $0x24] sm:$0xf]
    %v203 = vld [vmem:[#allocation7 + $0x28] sm:$0xf]
    %v204 = vld [vmem:[#allocation7 + $0x2c] sm:$0xf]
    %v205 = vld [vmem:[#allocation7 + $0x30] sm:$0xf]
    %v206 = vld [vmem:[#allocation7 + $0x34] sm:$0xf]
    %v207 = vld [vmem:[#allocation7 + $0x38] sm:$0xf]
    %v208 = vld [vmem:[#allocation7 + $0x3c] sm:$0xf]
    %v209 = vld [vmem:[%s4] sm:$0x1]
    %v211 = vperm.slane %v209, 0
    %v229 = vunpack.c.l.b16 %v193
    %v230 = vunpack.c.l.b16 %v194
    %v231 = vunpack.c.l.b16 %v195
    %v232 = vunpack.c.l.b16 %v196
    %v233 = vunpack.c.l.b16 %v197
    %v234 = vunpack.c.l.b16 %v198
    %v235 = vunpack.c.l.b16 %v199
    %v236 = vunpack.c.l.b16 %v200
    %v237 = vunpack.c.l.b16 %v201
    %v238 = vunpack.c.l.b16 %v202
    %v239 = vunpack.c.l.b16 %v203
    %v240 = vunpack.c.l.b16 %v204
    %v241 = vunpack.c.l.b16 %v205
    %v242 = vunpack.c.l.b16 %v206
    %v243 = vunpack.c.l.b16 %v207
    %v244 = vunpack.c.l.b16 %v208
    %v245 = vpack.c.b16 %v230, %v229
    %v246 = vpack.c.b16 %v232, %v231
    %v247 = vpack.c.b16 %v234, %v233
    %v248 = vpack.c.b16 %v236, %v235
    %v249 = vpack.c.b16 %v238, %v237
    %v250 = vpack.c.b16 %v240, %v239
    %v251 = vpack.c.b16 %v242, %v241
    %v252 = vpack.c.b16 %v244, %v243
    %261 = vmatpush.bf16.msra.mxu0 %v252
    %262 = vmatpush.bf16.msra.mxu0 %v251
    %263 = vmatpush.bf16.msra.mxu0 %v250
    %264 = vmatpush.bf16.msra.mxu0 %v249
    %265 = vmatpush.bf16.msra.mxu0 %v248
    %266 = vmatpush.bf16.msra.mxu0 %v247
    %267 = vmatpush.bf16.msra.mxu0 %v246
    %268 = vmatpush.bf16.msra.mxu0 %v245
    %269 = vmatmul.bf16.gmra.mxu0 %v192
    %v270 = vpop.f32.mrf.mxu0
    %v271 = vadd.f32 %v211, %v270
    %v272 = vpop.f32.mrf.mxu0
    %v273 = vadd.f32 %v211, %v272
    %274 = vdwg.mxu0
    %v275 = vmax.f32 %v271, 0.0
    %v276 = vmax.f32 %v273, 0.0
    %v277 = vpack.c.bf16 %v276, %v275
    %v278 = vld [vmem:[#allocation8] sm:$0xf]
    %v279 = vld [vmem:[#allocation8 + $0x4] sm:$0xf]
    %v280 = vld [vmem:[#allocation8 + $0x8] sm:$0xf]
    %v281 = vld [vmem:[#allocation8 + $0xc] sm:$0xf]
    %v282 = vld [vmem:[#allocation8 + $0x10] sm:$0xf]
    %v283 = vld [vmem:[#allocation8 + $0x14] sm:$0xf]
    %v284 = vld [vmem:[#allocation8 + $0x18] sm:$0xf]
    %v285 = vld [vmem:[#allocation8 + $0x1c] sm:$0xf]
    %v286 = vld [vmem:[#allocation8 + $0x20] sm:$0xf]
    %v287 = vld [vmem:[#allocation8 + $0x24] sm:$0xf]
    %v288 = vld [vmem:[#allocation8 + $0x28] sm:$0xf]
    %v289 = vld [vmem:[#allocation8 + $0x2c] sm:$0xf]
    %v290 = vld [vmem:[#allocation8 + $0x30] sm:$0xf]
    %v291 = vld [vmem:[#allocation8 + $0x34] sm:$0xf]
    %v292 = vld [vmem:[#allocation8 + $0x38] sm:$0xf]
    %v293 = vld [vmem:[#allocation8 + $0x3c] sm:$0xf]
    %v294 = vld [vmem:[%s6] sm:$0x1]
    %v296 = vperm.slane %v294, 0
    %v314 = vunpack.c.l.b16 %v278
    %v315 = vunpack.c.l.b16 %v279
    %v316 = vunpack.c.l.b16 %v280
    %v317 = vunpack.c.l.b16 %v281
    %v318 = vunpack.c.l.b16 %v282
    %v319 = vunpack.c.l.b16 %v283
    %v320 = vunpack.c.l.b16 %v284
    %v321 = vunpack.c.l.b16 %v285
    %v322 = vunpack.c.l.b16 %v286
    %v323 = vunpack.c.l.b16 %v287
    %v324 = vunpack.c.l.b16 %v288
    %v325 = vunpack.c.l.b16 %v289
    %v326 = vunpack.c.l.b16 %v290
    %v327 = vunpack.c.l.b16 %v291
    %v328 = vunpack.c.l.b16 %v292
    %v329 = vunpack.c.l.b16 %v293
    %v330 = vpack.c.b16 %v315, %v314
    %v331 = vpack.c.b16 %v317, %v316
    %v332 = vpack.c.b16 %v319, %v318
    %v333 = vpack.c.b16 %v321, %v320
    %v334 = vpack.c.b16 %v323, %v322
    %v335 = vpack.c.b16 %v325, %v324
    %v336 = vpack.c.b16 %v327, %v326
    %v337 = vpack.c.b16 %v329, %v328
    %346 = vmatpush.bf16.msra.mxu0 %v337
    %347 = vmatpush.bf16.msra.mxu0 %v336
    %348 = vmatpush.bf16.msra.mxu0 %v335
    %349 = vmatpush.bf16.msra.mxu0 %v334
    %350 = vmatpush.bf16.msra.mxu0 %v333
    %351 = vmatpush.bf16.msra.mxu0 %v332
    %352 = vmatpush.bf16.msra.mxu0 %v331
    %353 = vmatpush.bf16.msra.mxu0 %v330
    %354 = vmatmul.bf16.gmra.mxu0 %v277
    %v355 = vpop.f32.mrf.mxu0
    %v356 = vadd.f32 %v296, %v355
    %v357 = vpop.f32.mrf.mxu0
    %v358 = vadd.f32 %v296, %v357
    %359 = vdwg.mxu0
    %v360 = vmax.f32 %v356, 0.0
    %v361 = vmax.f32 %v358, 0.0
    %v362 = vpack.c.bf16 %v361, %v360
    %v363 = vld [vmem:[#allocation10] sm:$0xf]
    %v364 = vld [vmem:[#allocation10 + $0x4] sm:$0xf]
    %v365 = vld [vmem:[#allocation10 + $0x8] sm:$0xf]
    %v366 = vld [vmem:[#allocation10 + $0xc] sm:$0xf]
    %v367 = vld [vmem:[#allocation10 + $0x10] sm:$0xf]
    %v368 = vld [vmem:[#allocation10 + $0x14] sm:$0xf]
    %v369 = vld [vmem:[#allocation10 + $0x18] sm:$0xf]
    %v370 = vld [vmem:[#allocation10 + $0x1c] sm:$0xf]
    %v371 = vld [vmem:[#allocation10 + $0x20] sm:$0xf]
    %v372 = vld [vmem:[#allocation10 + $0x24] sm:$0xf]
    %v373 = vld [vmem:[#allocation10 + $0x28] sm:$0xf]
    %v374 = vld [vmem:[#allocation10 + $0x2c] sm:$0xf]
    %v375 = vld [vmem:[#allocation10 + $0x30] sm:$0xf]
    %v376 = vld [vmem:[#allocation10 + $0x34] sm:$0xf]
    %v377 = vld [vmem:[#allocation10 + $0x38] sm:$0xf]
    %v378 = vld [vmem:[#allocation10 + $0x3c] sm:$0xf]
    %v379 = vld [vmem:[%s8] sm:$0x1]
    %v381 = vperm.slane %v379, 0
    %v399 = vunpack.c.l.b16 %v363
    %v400 = vunpack.c.l.b16 %v364
    %v401 = vunpack.c.l.b16 %v365
    %v402 = vunpack.c.l.b16 %v366
    %v403 = vunpack.c.l.b16 %v367
    %v404 = vunpack.c.l.b16 %v368
    %v405 = vunpack.c.l.b16 %v369
    %v406 = vunpack.c.l.b16 %v370
    %v407 = vunpack.c.l.b16 %v371
    %v408 = vunpack.c.l.b16 %v372
    %v409 = vunpack.c.l.b16 %v373
    %v410 = vunpack.c.l.b16 %v374
    %v411 = vunpack.c.l.b16 %v375
    %v412 = vunpack.c.l.b16 %v376
    %v413 = vunpack.c.l.b16 %v377
    %v414 = vunpack.c.l.b16 %v378
    %v415 = vpack.c.b16 %v400, %v399
    %v416 = vpack.c.b16 %v402, %v401
    %v417 = vpack.c.b16 %v404, %v403
    %v418 = vpack.c.b16 %v406, %v405
    %v419 = vpack.c.b16 %v408, %v407
    %v420 = vpack.c.b16 %v410, %v409
    %v421 = vpack.c.b16 %v412, %v411
    %v422 = vpack.c.b16 %v414, %v413
    %431 = vmatpush.bf16.msra.mxu0 %v422
    %432 = vmatpush.bf16.msra.mxu0 %v421
    %433 = vmatpush.bf16.msra.mxu0 %v420
    %434 = vmatpush.bf16.msra.mxu0 %v419
    %435 = vmatpush.bf16.msra.mxu0 %v418
    %436 = vmatpush.bf16.msra.mxu0 %v417
    %437 = vmatpush.bf16.msra.mxu0 %v416
    %438 = vmatpush.bf16.msra.mxu0 %v415
    %439 = vmatmul.bf16.gmra.mxu0 %v362
    %v440 = vpop.f32.mrf.mxu0
    %v441 = vadd.f32 %v381, %v440
    %v442 = vpop.f32.mrf.mxu0
    %v443 = vadd.f32 %v381, %v442
    %444 = vdwg.mxu0
    %v445 = vmax.f32 %v441, 0.0
    %v446 = vmax.f32 %v443, 0.0
    %v447 = vpack.c.bf16 %v446, %v445
    %v448 = vld [vmem:[#allocation11] sm:$0xf]
    %v449 = vld [vmem:[#allocation11 + $0x4] sm:$0xf]
    %v450 = vld [vmem:[#allocation11 + $0x8] sm:$0xf]
    %v451 = vld [vmem:[#allocation11 + $0xc] sm:$0xf]
    %v452 = vld [vmem:[#allocation11 + $0x10] sm:$0xf]
    %v453 = vld [vmem:[#allocation11 + $0x14] sm:$0xf]
    %v454 = vld [vmem:[#allocation11 + $0x18] sm:$0xf]
    %v455 = vld [vmem:[#allocation11 + $0x1c] sm:$0xf]
    %v456 = vld [vmem:[#allocation11 + $0x20] sm:$0xf]
    %v457 = vld [vmem:[#allocation11 + $0x24] sm:$0xf]
    %v458 = vld [vmem:[#allocation11 + $0x28] sm:$0xf]
    %v459 = vld [vmem:[#allocation11 + $0x2c] sm:$0xf]
    %v460 = vld [vmem:[#allocation11 + $0x30] sm:$0xf]
    %v461 = vld [vmem:[#allocation11 + $0x34] sm:$0xf]
    %v462 = vld [vmem:[#allocation11 + $0x38] sm:$0xf]
    %v463 = vld [vmem:[#allocation11 + $0x3c] sm:$0xf]
    %v480 = vunpack.c.l.b16 %v448
    %v481 = vunpack.c.l.b16 %v449
    %v482 = vunpack.c.l.b16 %v450
    %v483 = vunpack.c.l.b16 %v451
    %v484 = vunpack.c.l.b16 %v452
    %v485 = vunpack.c.l.b16 %v453
    %v486 = vunpack.c.l.b16 %v454
    %v487 = vunpack.c.l.b16 %v455
    %v488 = vunpack.c.l.b16 %v456
    %v489 = vunpack.c.l.b16 %v457
    %v490 = vunpack.c.l.b16 %v458
    %v491 = vunpack.c.l.b16 %v459
    %v492 = vunpack.c.l.b16 %v460
    %v493 = vunpack.c.l.b16 %v461
    %v494 = vunpack.c.l.b16 %v462
    %v495 = vunpack.c.l.b16 %v463
    %v496 = vpack.c.b16 %v481, %v480
    %v497 = vpack.c.b16 %v483, %v482
    %v498 = vpack.c.b16 %v485, %v484
    %v499 = vpack.c.b16 %v487, %v486
    %v500 = vpack.c.b16 %v489, %v488
    %v501 = vpack.c.b16 %v491, %v490
    %v502 = vpack.c.b16 %v493, %v492
    %v503 = vpack.c.b16 %v495, %v494
    %512 = vmatpush.bf16.msra.mxu0 %v503
    %513 = vmatpush.bf16.msra.mxu0 %v502
    %514 = vmatpush.bf16.msra.mxu0 %v501
    %515 = vmatpush.bf16.msra.mxu0 %v500
    %516 = vmatpush.bf16.msra.mxu0 %v499
    %517 = vmatpush.bf16.msra.mxu0 %v498
    %518 = vmatpush.bf16.msra.mxu0 %v497
    %519 = vmatpush.bf16.msra.mxu0 %v496
    %520 = vmatmul.bf16.gmra.mxu0 %v447
    %v521 = vpop.f32.mrf.mxu0
    %v522 = vadd.f32 0.0, %v521
    %v523 = vpop.f32.mrf.mxu0
    %v524 = vadd.f32 0.0, %v523
    %525 = vdwg.mxu0
    %v526 = vpack.c.bf16 %v524, %v522
    %v527 = vld [vmem:[#allocation13] sm:$0xf]
    %v528 = vld [vmem:[#allocation13 + $0x4] sm:$0xf]
    %v529 = vld [vmem:[#allocation13 + $0x8] sm:$0xf]
    %v530 = vld [vmem:[#allocation13 + $0xc] sm:$0xf]
    %v531 = vld [vmem:[#allocation13 + $0x10] sm:$0xf]
    %v532 = vld [vmem:[#allocation13 + $0x14] sm:$0xf]
    %v533 = vld [vmem:[#allocation13 + $0x18] sm:$0xf]
    %v534 = vld [vmem:[#allocation13 + $0x1c] sm:$0xf]
    %v535 = vld [vmem:[#allocation13 + $0x20] sm:$0xf]
    %v536 = vld [vmem:[#allocation13 + $0x24] sm:$0xf]
    %v537 = vld [vmem:[#allocation13 + $0x28] sm:$0xf]
    %v538 = vld [vmem:[#allocation13 + $0x2c] sm:$0xf]
    %v539 = vld [vmem:[#allocation13 + $0x30] sm:$0xf]
    %v540 = vld [vmem:[#allocation13 + $0x34] sm:$0xf]
    %v541 = vld [vmem:[#allocation13 + $0x38] sm:$0xf]
    %v542 = vld [vmem:[#allocation13 + $0x3c] sm:$0xf]
    %v543 = vld [vmem:[%s11] sm:$0x1]
    %v545 = vperm.slane %v543, 0
    %v563 = vunpack.c.l.b16 %v527
    %v564 = vunpack.c.l.b16 %v528
    %v565 = vunpack.c.l.b16 %v529
    %v566 = vunpack.c.l.b16 %v530
    %v567 = vunpack.c.l.b16 %v531
    %v568 = vunpack.c.l.b16 %v532
    %v569 = vunpack.c.l.b16 %v533
    %v570 = vunpack.c.l.b16 %v534
    %v571 = vunpack.c.l.b16 %v535
    %v572 = vunpack.c.l.b16 %v536
    %v573 = vunpack.c.l.b16 %v537
    %v574 = vunpack.c.l.b16 %v538
    %v575 = vunpack.c.l.b16 %v539
    %v576 = vunpack.c.l.b16 %v540
    %v577 = vunpack.c.l.b16 %v541
    %v578 = vunpack.c.l.b16 %v542
    %v579 = vpack.c.b16 %v564, %v563
    %v580 = vpack.c.b16 %v566, %v565
    %v581 = vpack.c.b16 %v568, %v567
    %v582 = vpack.c.b16 %v570, %v569
    %v583 = vpack.c.b16 %v572, %v571
    %v584 = vpack.c.b16 %v574, %v573
    %v585 = vpack.c.b16 %v576, %v575
    %v586 = vpack.c.b16 %v578, %v577
    %595 = vmatpush.bf16.msra.mxu0 %v586
    %596 = vmatpush.bf16.msra.mxu0 %v585
    %597 = vmatpush.bf16.msra.mxu0 %v584
    %598 = vmatpush.bf16.msra.mxu0 %v583
    %599 = vmatpush.bf16.msra.mxu0 %v582
    %600 = vmatpush.bf16.msra.mxu0 %v581
    %601 = vmatpush.bf16.msra.mxu0 %v580
    %602 = vmatpush.bf16.msra.mxu0 %v579
    %603 = vmatmul.bf16.gmra.mxu0 %v526
    %v604 = vpop.f32.mrf.mxu0
    %v605 = vadd.f32 %v545, %v604
    %v606 = vpop.f32.mrf.mxu0
    %v607 = vadd.f32 %v545, %v606
    %608 = vdwg.mxu0
    %609 = vst [vmem:[#allocation14] sm:$0xff] %v605
    %610 = vst [vmem:[#allocation14 + $0x8] sm:$0xff] %v607
    // Predicated region
    $region78: #{tpu_custom_call.1} parent=1 // pred_check
      _
    $region79: #{tpu_custom_call.1} parent=1 // pred_check_branch
      %612 = sbr.rel (0) target = $region81
    $region80: #{tpu_custom_call.1} parent=1 // pred_region
      %614 = vsyncadd [#allocation4], 0
      %s615 = sshll.u32 [#allocation14], 4
      %s616 = int_to_ptr.vmem [resolvable:$true] %s615
      %s617 = sshll.u32 %s12, 4
      %s618 = int_to_ptr.hbm [resolvable:$true] %s617
      %623 = dma.vmem_to_hbm [thread:$0]  %s616, 256, %s618, [#allocation4], 128, 128, 8
    $region81: #{tpu_custom_call.1} parent=1 // pred_fallthru
      _
    // Predicated region
    $region82: #{tpu_custom_call.1} parent=1 // pred_check
      _
    $region83: #{tpu_custom_call.1} parent=1 // pred_check_branch
      %625 = sbr.rel (0) target = $region85
    $region84: #{tpu_custom_call.1} parent=1 // pred_region
      %627 = dma.done [#allocation4], 256
    $region85: #{tpu_custom_call.1} parent=1 // pred_fallthru
      _
    %628 = vsyncpa [#allocation3], 1
    %629 = vsyncpa [#allocation6], 1
    %630 = vsyncpa [#allocation9], 1
    %631 = vsyncpa [#allocation12], 1
    %632 = vsyncpa [#allocation4], 1

</llo_original>
